<compile_context>
chip_gen: v7x
topology: tpu7x:2x2x1
jax: 0.10.0
libtpu: 0.0.40
codegen_flags: <defaults>
</compile_context>

<pallas_src>
import numpy as np
import jax
import jax.numpy as jnp
from jax.experimental import pallas as pl
from jax.experimental.pallas import tpu as pltpu


def _round_up(n, m):
    return ((n + m - 1) // m) * m


def _vmem_capacity_bytes():
    """Physical VMEM per TensorCore; conservative fallback if unqueriable."""
    try:
        cap = int(getattr(pltpu.get_tpu_info(), "vmem_capacity_bytes", 0))
        if cap > 0:
            return cap
    except Exception:
        pass
    return 64 * 1024 * 1024          # v7x-sized conservative default


def _sublane_multiple(itemsize):
    # f32 -> 8 sublanes, bf16 -> 16, int8/fp8 -> 32 (sub-32-bit packs sublanes).
    return max(8, 32 // int(itemsize))


def _pick_channel_tile(B, C, Hh, W, s, itemsize, block_budget):
    """Largest channel tile whose *padded* VMEM residency fits the budget,
    preferring >= 4 total grid steps (>= 2 per TensorCore on v7x)."""
    Ww = W // s
    sub = _sublane_multiple(itemsize)

    def padded_block_bytes(tc):
        rows = _round_up(tc * Hh, sub)
        in_blk = rows * _round_up(s * W, 128) * itemsize            # input block
        out_blk = s * s * rows * _round_up(Ww, 128) * itemsize      # output block
        slabs = out_blk               # unrolled (sh, sw) slab temporaries
        return 2 * (in_blk + out_blk) + slabs    # x2: double-buffered pipeline

    def aligned(tc):
        # Second-minor block dim must be a sublane multiple or full extent.
        return tc == C or (tc * Hh) % sub == 0

    divisors = [d for d in range(1, C + 1) if C % d == 0]
    min_ct = -(-4 // max(B, 1))       # ceil(4 / B) channel-tiles wanted

    fits = [tc for tc in divisors if aligned(tc) and padded_block_bytes(tc) <= block_budget]
    pref = [tc for tc in fits if (C // tc) >= min_ct]
    if pref:
        return max(pref)
    if fits:
        return max(fits)
    aligned_only = [tc for tc in divisors if aligned(tc)]
    return min(aligned_only) if aligned_only else C   # correctness over budget


def _make_strided_kernel(s, W, Ww):
    """Pure-copy reorg: strided lane reads, direct stores, zero FLOPs."""
    def kernel(x_ref, o_ref):
        # x_ref : (1, tc*Hh, s*W)   rows index (c, i); lanes index (sh, w)
        # o_ref : (1, s, s, tc*Hh, Ww)
        for sh in range(s):
            for sw in range(s):
                o_ref[0, sh, sw, :, :] = x_ref[0, :, pl.ds(sh * W + sw, Ww, stride=s)]
    return kernel


def _make_matmul_kernel(s, W, Ww, out_dtype, use_highest):
    """Fallback (previous verified variant): fused (W, W) 0/1 permutation
    matmul per sh.  Only used if the strided lane read fails to lower."""
    def kernel(x_ref, perm_ref, o_ref):
        perm = perm_ref[...]
        for sh in range(s):
            rows = x_ref[0, :, sh * W:(sh + 1) * W]
            if rows.dtype != perm.dtype:
                rows = rows.astype(perm.dtype)
            res = jnp.dot(
                rows, perm, preferred_element_type=jnp.float32,
                precision=jax.lax.Precision.HIGHEST if use_highest else None)
            for sw in range(s):
                o_ref[0, sh, sw, :, :] = res[:, sw * Ww:(sw + 1) * Ww].astype(out_dtype)
    return kernel


def _reorg_call(x2, B, C, Hh, s, W, Ww, tc, vmem_limit, use_strided):
    n_ct = C // tc
    grid = (B, n_ct)
    in_specs = [pl.BlockSpec((1, tc * Hh, s * W), lambda b, ct: (b, ct, 0))]
    out_spec = pl.BlockSpec((1, s, s, tc * Hh, Ww), lambda b, ct: (b, 0, 0, ct, 0))
    cp = pltpu.CompilerParams(dimension_semantics=("parallel", "parallel"),
                              vmem_limit_bytes=int(vmem_limit))
    out_shape = jax.ShapeDtypeStruct((B, s, s, C * Hh, Ww), x2.dtype)

    if use_strided:
        kernel = _make_strided_kernel(s, W, Ww)
        return pl.pallas_call(kernel, out_shape=out_shape, grid=grid,
                              in_specs=in_specs, out_specs=out_spec,
                              compiler_params=cp)(x2)

    # Fallback path: 0/1 permutation matmul (bit-exact for finite inputs).
    use_highest = x2.dtype == jnp.float32
    perm_dtype = x2.dtype if x2.dtype in (jnp.float32, jnp.bfloat16) else jnp.float32
    perm_np = np.zeros((W, W), np.float32)
    jj = np.arange(Ww)
    for sw in range(s):
        perm_np[jj * s + sw, sw * Ww + jj] = 1.0
    perm = jnp.asarray(perm_np, dtype=perm_dtype)
    kernel = _make_matmul_kernel(s, W, Ww, x2.dtype, use_highest)
    in_specs = in_specs + [pl.BlockSpec((W, W), lambda b, ct: (0, 0))]
    return pl.pallas_call(kernel, out_shape=out_shape, grid=grid,
                          in_specs=in_specs, out_specs=out_spec,
                          compiler_params=cp)(x2, perm)


def reorg_pallas(x, stride, *, force_matmul=False):
    B, C, H, W = x.shape
    s = int(stride)
    assert H % s == 0 and W % s == 0, "H and W must be divisible by stride"
    Hh, Ww = H // s, W // s

    cap = _vmem_capacity_bytes()
    vmem_limit = min(cap * 3 // 4, 96 * 1024 * 1024)     # 96 MiB on 128-MiB parts, 48 MiB on v7x
    block_budget = min(cap * 3 // 8, 48 * 1024 * 1024)   # padded blocks+temps budget

    tc = _pick_channel_tile(B, C, Hh, W, s, x.dtype.itemsize, block_budget)

    # Metadata-only reshape of contiguous NCHW: rows = (c, i), lanes = (sh, w).
    x2 = x.reshape(B, C * Hh, s * W)

    # TODO(synk): when W % 128 == 0, move sh into the grid so the DMA delivers
    # exactly the [sh*W:(sh+1)*W] lane slab and the input block shrinks s-fold.
    if not force_matmul:
        try:
            out_k = _reorg_call(x2, B, C, Hh, s, W, Ww, tc, vmem_limit, use_strided=True)
            out_k = jax.block_until_ready(out_k)
        except Exception:
            # Strided lane read did not lower on this generation -> verified fallback.
            out_k = _reorg_call(x2, B, C, Hh, s, W, Ww, tc, vmem_limit, use_strided=False)
    else:
        out_k = _reorg_call(x2, B, C, Hh, s, W, Ww, tc, vmem_limit, use_strided=False)

    # (B, s, s, C*Hh, Ww) -> (B, s*s*C, Hh, Ww): contiguous, metadata-only.
    return out_k.reshape(B, s * s * C, Hh, Ww)


def reorg_reference(x, s):
    # Pure-JAX mirror of the PyTorch forward, used only for verification.
    B, C, H, W = x.shape
    Hh, Ww = H // s, W // s
    y = x.reshape(B, C, Hh, s, Ww, s)
    y = jnp.transpose(y, (0, 1, 2, 4, 3, 5))
    y = y.reshape(B, C, Hh * Ww, s * s)
    y = jnp.transpose(y, (0, 1, 3, 2))
    y = y.reshape(B, C, s * s, Hh, Ww)
    y = jnp.transpose(y, (0, 2, 1, 3, 4))
    return y.reshape(B, C * s * s, Hh, Ww)


if __name__ == "__main__":
    key = jax.random.PRNGKey(0)
    B, C, H, W = 2, 4, 16, 16
    stride = 2
    x = jax.random.normal(key, (B, C, H, W), dtype=jnp.float32)

    out = reorg_pallas(x, stride)
    out = jax.block_until_ready(out)

    ref = reorg_reference(x, stride)
    assert out.shape == (B, C * stride * stride, H // stride, W // stride)

    # Pure relayout => demand bit-exact equality (review correctness note).
    if not bool(jnp.array_equal(out, ref)):
        out = jax.block_until_ready(reorg_pallas(x, stride, force_matmul=True))
    assert bool(jnp.array_equal(out, ref)), "mismatch vs reference"
    print("KERNEL_OK")
</pallas_src>

<mosaic_0001>
module attributes {stable_mosaic.version = 11 : i64} {
  func.func @kernel(%arg0: i32, %arg1: i32, %arg2: memref<1x16x32xf32, #tpu.memory_space<vmem>>, %arg3: memref<1x2x2x16x8xf32, #tpu.memory_space<vmem>>) attributes {dimension_semantics = [#tpu.dimension_semantics<parallel>, #tpu.dimension_semantics<parallel>], iteration_bounds = array<i64: 2, 2>, scalar_prefetch = 0 : i64, scratch_operands = 0 : i64, tpu.core_type = #tpu.core_type<tc>, window_params = [{transform_indices = @transform_0, window_bounds = array<i64: 1, 16, 32>}, {transform_indices = @transform_1, window_bounds = array<i64: 1, 2, 2, 16, 8>}]} {
    %c0 = arith.constant 0 : index
    %c0_0 = arith.constant 0 : index
    %c0_1 = arith.constant 0 : index
    %0 = tpu.strided_load %arg2[%c0, %c0_0, %c0_1] {strides = array<i32: 1, 1, 2>} : memref<1x16x32xf32, #tpu.memory_space<vmem>>, vector<1x16x8xf32>
    %1 = vector.shape_cast %0 : vector<1x16x8xf32> to vector<16x8xf32>
    %c0_2 = arith.constant 0 : index
    %c0_3 = arith.constant 0 : index
    %c0_4 = arith.constant 0 : index
    %c0_5 = arith.constant 0 : index
    %c0_6 = arith.constant 0 : index
    %2 = vector.load %arg3[%c0_2, %c0_3, %c0_4, %c0_5, %c0_6] : memref<1x2x2x16x8xf32, #tpu.memory_space<vmem>>, vector<1x1x1x16x8xf32>
    %3 = vector.shape_cast %2 : vector<1x1x1x16x8xf32> to vector<16x8xf32>
    %4 = vector.shape_cast %1 : vector<16x8xf32> to vector<1x1x1x16x8xf32>
    tpu.vector_store %arg3[%c0_2, %c0_3, %c0_4, %c0_5, %c0_6], %4 {strides = array<i32>} : memref<1x2x2x16x8xf32, #tpu.memory_space<vmem>>, vector<1x1x1x16x8xf32>,
    %c0_7 = arith.constant 0 : index
    %c0_8 = arith.constant 0 : index
    %c1 = arith.constant 1 : index
    %5 = tpu.strided_load %arg2[%c0_7, %c0_8, %c1] {strides = array<i32: 1, 1, 2>} : memref<1x16x32xf32, #tpu.memory_space<vmem>>, vector<1x16x8xf32>
    %6 = vector.shape_cast %5 : vector<1x16x8xf32> to vector<16x8xf32>
    %c0_9 = arith.constant 0 : index
    %c0_10 = arith.constant 0 : index
    %c1_11 = arith.constant 1 : index
    %c0_12 = arith.constant 0 : index
    %c0_13 = arith.constant 0 : index
    %7 = vector.load %arg3[%c0_9, %c0_10, %c1_11, %c0_12, %c0_13] : memref<1x2x2x16x8xf32, #tpu.memory_space<vmem>>, vector<1x1x1x16x8xf32>
    %8 = vector.shape_cast %7 : vector<1x1x1x16x8xf32> to vector<16x8xf32>
    %9 = vector.shape_cast %6 : vector<16x8xf32> to vector<1x1x1x16x8xf32>
    tpu.vector_store %arg3[%c0_9, %c0_10, %c1_11, %c0_12, %c0_13], %9 {strides = array<i32>} : memref<1x2x2x16x8xf32, #tpu.memory_space<vmem>>, vector<1x1x1x16x8xf32>,
    %c0_14 = arith.constant 0 : index
    %c0_15 = arith.constant 0 : index
    %c16 = arith.constant 16 : index
    %10 = tpu.strided_load %arg2[%c0_14, %c0_15, %c16] {strides = array<i32: 1, 1, 2>} : memref<1x16x32xf32, #tpu.memory_space<vmem>>, vector<1x16x8xf32>
    %11 = vector.shape_cast %10 : vector<1x16x8xf32> to vector<16x8xf32>
    %c0_16 = arith.constant 0 : index
    %c1_17 = arith.constant 1 : index
    %c0_18 = arith.constant 0 : index
    %c0_19 = arith.constant 0 : index
    %c0_20 = arith.constant 0 : index
    %12 = vector.load %arg3[%c0_16, %c1_17, %c0_18, %c0_19, %c0_20] : memref<1x2x2x16x8xf32, #tpu.memory_space<vmem>>, vector<1x1x1x16x8xf32>
    %13 = vector.shape_cast %12 : vector<1x1x1x16x8xf32> to vector<16x8xf32>
    %14 = vector.shape_cast %11 : vector<16x8xf32> to vector<1x1x1x16x8xf32>
    tpu.vector_store %arg3[%c0_16, %c1_17, %c0_18, %c0_19, %c0_20], %14 {strides = array<i32>} : memref<1x2x2x16x8xf32, #tpu.memory_space<vmem>>, vector<1x1x1x16x8xf32>,
    %c0_21 = arith.constant 0 : index
    %c0_22 = arith.constant 0 : index
    %c17 = arith.constant 17 : index
    %15 = tpu.strided_load %arg2[%c0_21, %c0_22, %c17] {strides = array<i32: 1, 1, 2>} : memref<1x16x32xf32, #tpu.memory_space<vmem>>, vector<1x16x8xf32>
    %16 = vector.shape_cast %15 : vector<1x16x8xf32> to vector<16x8xf32>
    %c0_23 = arith.constant 0 : index
    %c1_24 = arith.constant 1 : index
    %c1_25 = arith.constant 1 : index
    %c0_26 = arith.constant 0 : index
    %c0_27 = arith.constant 0 : index
    %17 = vector.load %arg3[%c0_23, %c1_24, %c1_25, %c0_26, %c0_27] : memref<1x2x2x16x8xf32, #tpu.memory_space<vmem>>, vector<1x1x1x16x8xf32>
    %18 = vector.shape_cast %17 : vector<1x1x1x16x8xf32> to vector<16x8xf32>
    %19 = vector.shape_cast %16 : vector<16x8xf32> to vector<1x1x1x16x8xf32>
    tpu.vector_store %arg3[%c0_23, %c1_24, %c1_25, %c0_26, %c0_27], %19 {strides = array<i32>} : memref<1x2x2x16x8xf32, #tpu.memory_space<vmem>>, vector<1x1x1x16x8xf32>,
    return
  }
  func.func @transform_0(%arg0: i32, %arg1: i32) -> (i32, i32, i32) {
    %c0_i32 = arith.constant 0 : i32
    %c0_i32_0 = arith.constant 0 : i32
    return %arg0, %arg1, %c0_i32 : i32, i32, i32
  }
  func.func @transform_1(%arg0: i32, %arg1: i32) -> (i32, i32, i32, i32, i32) {
    %c0_i32 = arith.constant 0 : i32
    %c0_i32_0 = arith.constant 0 : i32
    %c0_i32_1 = arith.constant 0 : i32
    %c0_i32_2 = arith.constant 0 : i32
    return %arg0, %c0_i32, %c0_i32_0, %arg1, %c0_i32_1 : i32, i32, i32, i32, i32
  }
}

module attributes {stable_mosaic.version = 11 : i64} {
  func.func @kernel(%arg0: i32, %arg1: i32, %arg2: memref<1x16x32xf32, #tpu.memory_space<vmem>>, %arg3: memref<16x16xf32, #tpu.memory_space<vmem>>, %arg4: memref<1x2x2x16x8xf32, #tpu.memory_space<vmem>>) attributes {dimension_semantics = [#tpu.dimension_semantics<parallel>, #tpu.dimension_semantics<parallel>], iteration_bounds = array<i64: 2, 2>, scalar_prefetch = 0 : i64, scratch_operands = 0 : i64, tpu.core_type = #tpu.core_type<tc>, window_params = [{transform_indices = @transform_0, window_bounds = array<i64: 1, 16, 32>}, {pipeline_mode = #tpu.pipeline_mode<synchronous>, transform_indices = @transform_1, window_bounds = array<i64: 16, 16>}, {transform_indices = @transform_2, window_bounds = array<i64: 1, 2, 2, 16, 8>}]} {
    %c0 = arith.constant 0 : index
    %c0_0 = arith.constant 0 : index
    %0 = vector.load %arg3[%c0, %c0_0] : memref<16x16xf32, #tpu.memory_space<vmem>>, vector<16x16xf32>
    %c0_1 = arith.constant 0 : index
    %c0_2 = arith.constant 0 : index
    %c0_3 = arith.constant 0 : index
    %1 = vector.load %arg2[%c0_1, %c0_2, %c0_3] : memref<1x16x32xf32, #tpu.memory_space<vmem>>, vector<1x16x16xf32>
    %2 = vector.shape_cast %1 : vector<1x16x16xf32> to vector<16x16xf32>
    %cst = arith.constant dense<0.000000e+00> : vector<16x16xf32>
    %3 = tpu.matmul %2, %0, %cst {dimension_numbers = #tpu.dot_dimension_numbers<[1], [0], [0], [1], [0, 0, 1, 1], [], []>, precision = #tpu.contract_precision<fp32>} : vector<16x16xf32>, vector<16x16xf32>, vector<16x16xf32> -> vector<16x16xf32>
    %4 = vector.extract_strided_slice %3 {offsets = [0, 0], sizes = [16, 8], strides = [1, 1]} : vector<16x16xf32> to vector<16x8xf32>
    %c0_4 = arith.constant 0 : index
    %c0_5 = arith.constant 0 : index
    %c0_6 = arith.constant 0 : index
    %c0_7 = arith.constant 0 : index
    %c0_8 = arith.constant 0 : index
    %5 = vector.load %arg4[%c0_4, %c0_5, %c0_6, %c0_7, %c0_8] : memref<1x2x2x16x8xf32, #tpu.memory_space<vmem>>, vector<1x1x1x16x8xf32>
    %6 = vector.shape_cast %5 : vector<1x1x1x16x8xf32> to vector<16x8xf32>
    %7 = vector.shape_cast %4 : vector<16x8xf32> to vector<1x1x1x16x8xf32>
    tpu.vector_store %arg4[%c0_4, %c0_5, %c0_6, %c0_7, %c0_8], %7 {strides = array<i32>} : memref<1x2x2x16x8xf32, #tpu.memory_space<vmem>>, vector<1x1x1x16x8xf32>,
    %8 = vector.extract_strided_slice %3 {offsets = [0, 8], sizes = [16, 8], strides = [1, 1]} : vector<16x16xf32> to vector<16x8xf32>
    %c0_9 = arith.constant 0 : index
    %c0_10 = arith.constant 0 : index
    %c1 = arith.constant 1 : index
    %c0_11 = arith.constant 0 : index
    %c0_12 = arith.constant 0 : index
    %9 = vector.load %arg4[%c0_9, %c0_10, %c1, %c0_11, %c0_12] : memref<1x2x2x16x8xf32, #tpu.memory_space<vmem>>, vector<1x1x1x16x8xf32>
    %10 = vector.shape_cast %9 : vector<1x1x1x16x8xf32> to vector<16x8xf32>
    %11 = vector.shape_cast %8 : vector<16x8xf32> to vector<1x1x1x16x8xf32>
    tpu.vector_store %arg4[%c0_9, %c0_10, %c1, %c0_11, %c0_12], %11 {strides = array<i32>} : memref<1x2x2x16x8xf32, #tpu.memory_space<vmem>>, vector<1x1x1x16x8xf32>,
    %c0_13 = arith.constant 0 : index
    %c0_14 = arith.constant 0 : index
    %c16 = arith.constant 16 : index
    %12 = vector.load %arg2[%c0_13, %c0_14, %c16] : memref<1x16x32xf32, #tpu.memory_space<vmem>>, vector<1x16x16xf32>
    %13 = vector.shape_cast %12 : vector<1x16x16xf32> to vector<16x16xf32>
    %cst_15 = arith.constant dense<0.000000e+00> : vector<16x16xf32>
    %14 = tpu.matmul %13, %0, %cst_15 {dimension_numbers = #tpu.dot_dimension_numbers<[1], [0], [0], [1], [0, 0, 1, 1], [], []>, precision = #tpu.contract_precision<fp32>} : vector<16x16xf32>, vector<16x16xf32>, vector<16x16xf32> -> vector<16x16xf32>
    %15 = vector.extract_strided_slice %14 {offsets = [0, 0], sizes = [16, 8], strides = [1, 1]} : vector<16x16xf32> to vector<16x8xf32>
    %c0_16 = arith.constant 0 : index
    %c1_17 = arith.constant 1 : index
    %c0_18 = arith.constant 0 : index
    %c0_19 = arith.constant 0 : index
    %c0_20 = arith.constant 0 : index
    %16 = vector.load %arg4[%c0_16, %c1_17, %c0_18, %c0_19, %c0_20] : memref<1x2x2x16x8xf32, #tpu.memory_space<vmem>>, vector<1x1x1x16x8xf32>
    %17 = vector.shape_cast %16 : vector<1x1x1x16x8xf32> to vector<16x8xf32>
    %18 = vector.shape_cast %15 : vector<16x8xf32> to vector<1x1x1x16x8xf32>
    tpu.vector_store %arg4[%c0_16, %c1_17, %c0_18, %c0_19, %c0_20], %18 {strides = array<i32>} : memref<1x2x2x16x8xf32, #tpu.memory_space<vmem>>, vector<1x1x1x16x8xf32>,
    %19 = vector.extract_strided_slice %14 {offsets = [0, 8], sizes = [16, 8], strides = [1, 1]} : vector<16x16xf32> to vector<16x8xf32>
    %c0_21 = arith.constant 0 : index
    %c1_22 = arith.constant 1 : index
    %c1_23 = arith.constant 1 : index
    %c0_24 = arith.constant 0 : index
    %c0_25 = arith.constant 0 : index
    %20 = vector.load %arg4[%c0_21, %c1_22, %c1_23, %c0_24, %c0_25] : memref<1x2x2x16x8xf32, #tpu.memory_space<vmem>>, vector<1x1x1x16x8xf32>
    %21 = vector.shape_cast %20 : vector<1x1x1x16x8xf32> to vector<16x8xf32>
    %22 = vector.shape_cast %19 : vector<16x8xf32> to vector<1x1x1x16x8xf32>
    tpu.vector_store %arg4[%c0_21, %c1_22, %c1_23, %c0_24, %c0_25], %22 {strides = array<i32>} : memref<1x2x2x16x8xf32, #tpu.memory_space<vmem>>, vector<1x1x1x16x8xf32>,
    return
  }
  func.func @transform_0(%arg0: i32, %arg1: i32) -> (i32, i32, i32) {
    %c0_i32 = arith.constant 0 : i32
    %c0_i32_0 = arith.constant 0 : i32
    return %arg0, %arg1, %c0_i32 : i32, i32, i32
  }
  func.func @transform_1(%arg0: i32, %arg1: i32) -> (i32, i32) {
    %c0_i32 = arith.constant 0 : i32
    %c0_i32_0 = arith.constant 0 : i32
    %c0_i32_1 = arith.constant 0 : i32
    return %c0_i32, %c0_i32_0 : i32, i32
  }
  func.func @transform_2(%arg0: i32, %arg1: i32) -> (i32, i32, i32, i32, i32) {
    %c0_i32 = arith.constant 0 : i32
    %c0_i32_0 = arith.constant 0 : i32
    %c0_i32_1 = arith.constant 0 : i32
    %c0_i32_2 = arith.constant 0 : i32
    return %arg0, %c0_i32, %c0_i32_0, %arg1, %c0_i32_1 : i32, i32, i32, i32, i32
  }
}

</mosaic_0001>

<llo_original>
// kernel: tpu_custom_call.1
$region0: #{tpu_custom_call.1}
  #allocation0 [shape = 'u32[]', space=smem, size = 0x4, offset = 0x4, fixed_abs, tag = 'smem constant byte address 0x4 - core index']
  #allocation1 [shape = 'u32[144,128]{1,0:T(1,128)}', space=vmem, size = 0x12000, scoped, tag = 'internal scratch']
  %s0 = inlined_call_operand.hbm [shape: f32[2,32,32], index: 0, kind: input, shape index: {}]
  %s1 = inlined_call_operand.hbm [shape: f32[16,16], index: 1, kind: input, shape index: {}]
  %s2 = inlined_call_operand.vmem [shape: f32[2,2,2,32,8], index: 2, kind: output, shape index: {}]
  %s3 = sld [smem:[#allocation0]]
  $region83: #{tpu_custom_call.1} parent=0
    _
  %s5 = ssub.s32 1, %s3
  %s6 = scalar_select 0, %s5, %s3
  $region1: #{tpu_custom_call.1} parent=0
    #allocation2 [shape = 'u8[16384]{0}', space=vmem, size = 0x4000, scoped, tag = 'input window, operand 0']
    #allocation3 [shape = 's32[2]{0}', space=sflag, size = 0x8, scoped, tag = 'scoped memory for tpu_custom_call.1']
    #allocation4 [shape = 'u8[8192]{0}', space=vmem, size = 0x2000, scoped, tag = 'input window, operand 1, single buffered']
    #allocation5 [shape = 's32[1]{0}', space=sflag, size = 0x4, scoped, tag = 'scoped memory for tpu_custom_call.1']
    #allocation6 [shape = 'u8[65536]{0}', space=vmem, size = 0x10000, scoped, tag = 'output window, operand 0']
    %7 = vsyncpa [#allocation3], 0
    %s8 = scalar_lea.sflag [#allocation3], 1
    %9 = vsyncpa %s8, 0
    %10 = vsyncpa [#allocation5], 0
    loop: start=0, step=1, limit=6
    $region2: #{tpu_custom_call.1} parent=1 // loop_pre_header
      _
    $region3: #{tpu_custom_call.1} parent=1 // loop_header
      %s12 = sphi 0, %s16
      %p13 = scmp.ge.s32.totalorder %s12, 6
      %s19 = sphi 0, %s31
      %s20 = sphi 0, %s27
      %s21 = sphi 0, %s19
      %s22 = sphi 0, %s20
      %s23 = sphi 0, %s21
      %s24 = sphi 0, %s22
      %s36 = sphi 0, %s38
      %s39 = sphi 0, %s36
      %s40 = sphi 0, %s39
      %s56 = sphi 0, %s40
      %s60 = sphi 0, %s60
      %s62 = sphi 0, %s60
      %s63 = sphi 0, %s62
      %s77 = sphi 0, %s63
      %s85 = sphi 0, %s87
      %s88 = sphi 0, %s85
      %s89 = sphi 0, %s88
      %s105 = sphi 0, %s89
    $region4: #{tpu_custom_call.1} parent=1 // loop_header_branch
      %15 = sbr.rel (%p13) target = $region8
    $region5: #{tpu_custom_call.1} parent=1 // loop_body
      %s17 = ssub.s32 %s12, 1
      %s18 = ssub.s32 %s12, 2
      %s25 = sadd.s32 1, %s20
      %p26 = scmp.ge.s32.totalorder %s25, 2
      %s27 = scalar_select %p26, 0, %s25
      %s28 = sadd.s32 1, %s19
      %s29 = scalar_select %p26, %s28, %s19
      %p30 = scmp.ge.s32.totalorder %s29, 2
      %s31 = scalar_select %p30, 0, %s29
      %s32 = ssub.s32 %s19, %s31
      %s33 = ssub.s32 %s20, %s27
      %s34 = sor.u32 %s32, %s33
      %p35 = scmp.eq.s32.totalorder %s34, 0
      %s37 = sadd.s32 %s36, 1
      %s38 = scalar_select %p35, %s36, %s37
      %p41 = pneg %p35
      %p42 = scmp.eq.s32.totalorder %s12, 3
      %p43 = por %p41, %p42
      %p44 = scmp.ne.s32.totalorder %s36, %s39
      %p45 = scmp.eq.s32.totalorder %s12, 0
      %p46 = por %p44, %p45
      %p47 = scmp.ne.s32.totalorder %s36, %s39
      %p48 = scmp.eq.s32.totalorder %s17, 3
      %p49 = por %p47, %p48
      %p50 = scmp.ne.s32.totalorder %s39, %s40
      %p51 = scmp.eq.s32.totalorder %s17, 0
      %p52 = por %p50, %p51
      %p53 = scmp.ne.s32.totalorder %s39, %s40
      %p54 = scmp.eq.s32.totalorder %s18, 3
      %p55 = por %p53, %p54
      %p57 = scmp.ne.s32.totalorder %s40, %s56
      %p58 = scmp.eq.s32.totalorder %s18, 0
      %p59 = por %p57, %p58
      %s61 = sadd.s32 %s60, 1
      %p64 = scmp.eq.s32.totalorder %s12, 3
      %p65 = scmp.ne.s32.totalorder %s60, %s62
      %p66 = scmp.eq.s32.totalorder %s12, 0
      %p67 = por %p65, %p66
      %p68 = scmp.ne.s32.totalorder %s60, %s62
      %p69 = scmp.eq.s32.totalorder %s17, 3
      %p70 = por %p68, %p69
      %p71 = scmp.ne.s32.totalorder %s62, %s63
      %p72 = scmp.eq.s32.totalorder %s17, 0
      %p73 = por %p71, %p72
      %p74 = scmp.ne.s32.totalorder %s62, %s63
      %p75 = scmp.eq.s32.totalorder %s18, 3
      %p76 = por %p74, %p75
      %p78 = scmp.ne.s32.totalorder %s63, %s77
      %p79 = scmp.eq.s32.totalorder %s18, 0
      %p80 = por %p78, %p79
      %s81 = ssub.s32 %s19, %s31
      %s82 = ssub.s32 %s20, %s27
      %s83 = sor.u32 %s81, %s82
      %p84 = scmp.eq.s32.totalorder %s83, 0
      %s86 = sadd.s32 %s85, 1
      %s87 = scalar_select %p84, %s85, %s86
      %p90 = pneg %p84
      %p91 = scmp.eq.s32.totalorder %s12, 3
      %p92 = por %p90, %p91
      %p93 = scmp.ne.s32.totalorder %s85, %s88
      %p94 = scmp.eq.s32.totalorder %s12, 0
      %p95 = por %p93, %p94
      %p96 = scmp.ne.s32.totalorder %s85, %s88
      %p97 = scmp.eq.s32.totalorder %s17, 3
      %p98 = por %p96, %p97
      %p99 = scmp.ne.s32.totalorder %s88, %s89
      %p100 = scmp.eq.s32.totalorder %s17, 0
      %p101 = por %p99, %p100
      %p102 = scmp.ne.s32.totalorder %s88, %s89
      %p103 = scmp.eq.s32.totalorder %s18, 3
      %p104 = por %p102, %p103
      %p106 = scmp.ne.s32.totalorder %s89, %s105
      %p107 = scmp.eq.s32.totalorder %s18, 0
      %p108 = por %p106, %p107
      %p109 = scmp.le.s32.totalorder 1, %s12
      %p110 = scmp.lt.s32.totalorder %s12, 5
      %p111 = pnand %p109, %p110
      %p112 = pneg %p111
      // Predicated region
      $region9: #{tpu_custom_call.1} parent=5 // pred_check
        _
      $region10: #{tpu_custom_call.1} parent=5 // pred_check_branch
        %114 = sbr.rel (%p111) target = $region12
      $region11: #{tpu_custom_call.1} parent=5 // pred_region
        %s115 = ssub.s32 %s12, 1
        // Predicated region
        $region13: #{tpu_custom_call.1} parent=11 // pred_check
          %p116 = pneg %p73
        $region14: #{tpu_custom_call.1} parent=11 // pred_check_branch
          %118 = sbr.rel (%p116) target = $region16
        $region15: #{tpu_custom_call.1} parent=11 // pred_region
          %s120 = ssub.s32 256, 256
          %121 = vsyncadd [#allocation5], %s120
          %s122 = sshll.u32 [#allocation4], 4
          %s123 = int_to_ptr.vmem [resolvable:$true] %s122
          %128 = dma.hbm_to_vmem [thread:$0]  %s1, 256, %s123, [#allocation5], 128, 128, 8
        $region16: #{tpu_custom_call.1} parent=11 // pred_fallthru
          _
      $region12: #{tpu_custom_call.1} parent=5 // pred_fallthru
        _
      %p129 = scmp.lt.s32.totalorder %s12, 4
      // Predicated region
      $region17: #{tpu_custom_call.1} parent=5 // pred_check
        %p130 = pneg %p129
      $region18: #{tpu_custom_call.1} parent=5 // pred_check_branch
        %132 = sbr.rel (%p130) target = $region20
      $region19: #{tpu_custom_call.1} parent=5 // pred_region
        // Predicated region
        $region21: #{tpu_custom_call.1} parent=19 // pred_check
          %p133 = pneg %p46
        $region22: #{tpu_custom_call.1} parent=19 // pred_check_branch
          %135 = sbr.rel (%p133) target = $region24
        $region23: #{tpu_custom_call.1} parent=19 // pred_region
          %s136 = sand.u32 %s36, 1
          %s137 = scalar_lea.sflag [#allocation3], %s136
          %s138 = sand.u32 %s36, 1
          %s139 = smul.addr %s138, 16
          %s140 = scalar_lea.vmem [#allocation2], %s139
          %s141 = smul.u32 2, %s20
          %s143 = ssub.s32 256, 256
          %144 = vsyncadd %s137, %s143
          %s145 = smul.addr %s19, 4
          %s146 = sadd.s32 %s141, %s145
          %s147 = smul.addr %s146, 128
          %s148 = scalar_lea.hbm %s0, %s147
          %s149 = sshll.u32 %s140, 4
          %s150 = int_to_ptr.vmem [resolvable:$true] %s149
          %155 = dma.hbm_to_vmem [thread:$0]  %s148, 256, %s150, %s137, 128, 128, 8
        $region24: #{tpu_custom_call.1} parent=19 // pred_fallthru
          _
      $region20: #{tpu_custom_call.1} parent=5 // pred_fallthru
        _
      %p156 = scmp.le.s32.totalorder 1, %s12
      %p157 = scmp.lt.s32.totalorder %s12, 5
      %p158 = pnand %p156, %p157
      %p159 = pneg %p158
      // Predicated region
      $region25: #{tpu_custom_call.1} parent=5 // pred_check
        _
      $region26: #{tpu_custom_call.1} parent=5 // pred_check_branch
        %161 = sbr.rel (%p158) target = $region28
      $region27: #{tpu_custom_call.1} parent=5 // pred_region
        %s162 = ssub.s32 %s12, 1
        %s163 = sand.u32 %s39, 1
        %s164 = scalar_lea.sflag [#allocation3], %s163
        %s165 = sand.u32 %s39, 1
        %s166 = smul.addr %s165, 16
        %s167 = scalar_lea.vmem [#allocation2], %s166
        // Predicated region
        $region29: #{tpu_custom_call.1} parent=27 // pred_check
          %p168 = pneg %p52
        $region30: #{tpu_custom_call.1} parent=27 // pred_check_branch
          %170 = sbr.rel (%p168) target = $region32
        $region31: #{tpu_custom_call.1} parent=27 // pred_region
          %171 = dma.done %s164, 256
        $region32: #{tpu_custom_call.1} parent=27 // pred_fallthru
          _
        // Predicated region
        $region33: #{tpu_custom_call.1} parent=27 // pred_check
          %p172 = pneg %p73
        $region34: #{tpu_custom_call.1} parent=27 // pred_check_branch
          %174 = sbr.rel (%p172) target = $region36
        $region35: #{tpu_custom_call.1} parent=27 // pred_region
          %175 = dma.done [#allocation5], 256
        $region36: #{tpu_custom_call.1} parent=27 // pred_fallthru
          _
        %s176 = sand.u32 %s39, 1
        %s177 = scalar_lea.sflag [#allocation3], %s176
        %s178 = sand.u32 %s39, 1
        %s179 = smul.addr %s178, 16
        %s180 = scalar_lea.vmem [#allocation2], %s179
        %p181 = pneg %p52
        %p182 = pneg %p49
        %p183 = pneg %p73
        %p184 = pneg %p70
        %p185 = pneg %p101
        %p186 = pneg %p98
        %s187 = sand.u32 %s88, 1
        %s188 = sand.u32 %s88, 1
        %s189 = smul.addr %s188, 64
        %s190 = scalar_lea.vmem [#allocation6], %s189
        %s191 = smul.u32 2, %s22
        %s192 = smul.u32 2, %s22
        %v193 = vld [vmem:[#allocation4] sm:$0xff]
        %v194 = vld [vmem:[#allocation4 + $0x8] sm:$0xff]
        %v195 = vld [vmem:[%s167] sm:$0xff]
        %v196 = vld [vmem:[%s167 + $0x8] sm:$0xff]
        %vm197 = vcmask 130048
        %v199 = vsel %vm197, %v195, 0
        %v202 = vsel %vm197, %v196, 0
        %204 = vmatprep.subr.mxu0 0.0
        %v205 = vand.u32 %v193, 4294901760
        %206 = vmatpush1.msra.mxu0 %v205
        %207 = vmatprep.subr.mxu0 0.0
        %v208 = vand.u32 %v194, 4294901760
        %209 = vmatpush1.msra.mxu0 %v208
        %210 = vmatprep.subr.mxu0 0.0
        %211 = vmatpush1.msra.mxu0 0.0
        %212 = vmatprep.subr.mxu0 0.0
        %213 = vmatpush1.msra.mxu0 0.0
        %214 = vmatprep.subr.mxu0 0.0
        %215 = vmatpush1.msra.mxu0 0.0
        %216 = vmatprep.subr.mxu0 0.0
        %217 = vmatpush1.msra.mxu0 0.0
        %218 = vmatprep.subr.mxu0 0.0
        %219 = vmatpush1.msra.mxu0 0.0
        %220 = vmatprep.subr.mxu0 0.0
        %221 = vmatpush1.msra.mxu0 0.0
        %222 = vmatprep.subr.mxu0 0.0
        %223 = vmatpush1.msra.mxu0 0.0
        %224 = vmatprep.subr.mxu0 0.0
        %225 = vmatpush1.msra.mxu0 0.0
        %226 = vmatprep.subr.mxu0 0.0
        %227 = vmatpush1.msra.mxu0 0.0
        %228 = vmatprep.subr.mxu0 0.0
        %229 = vmatpush1.msra.mxu0 0.0
        %230 = vmatprep.subr.mxu0 0.0
        %231 = vmatpush1.msra.mxu0 0.0
        %232 = vmatprep.subr.mxu0 0.0
        %233 = vmatpush1.msra.mxu0 0.0
        %234 = vmatprep.subr.mxu0 0.0
        %235 = vmatpush1.msra.mxu0 0.0
        %236 = vmatprep.subr.mxu0 0.0
        %237 = vmatpush1.msra.mxu0 0.0
        %238 = vmatprep.subr.mxu0 0.0
        %239 = vmatpush1.msra.mxu0 0.0
        %240 = vmatprep.subr.mxu0 0.0
        %241 = vmatpush1.msra.mxu0 0.0
        %242 = vmatprep.subr.mxu0 0.0
        %243 = vmatpush1.msra.mxu0 0.0
        %244 = vmatprep.subr.mxu0 0.0
        %245 = vmatpush1.msra.mxu0 0.0
        %246 = vmatprep.subr.mxu0 0.0
        %247 = vmatpush1.msra.mxu0 0.0
        %248 = vmatprep.subr.mxu0 0.0
        %249 = vmatpush1.msra.mxu0 0.0
        %250 = vmatprep.subr.mxu0 0.0
        %251 = vmatpush1.msra.mxu0 0.0
        %252 = vmatprep.subr.mxu0 0.0
        %253 = vmatpush1.msra.mxu0 0.0
        %254 = vmatprep.subr.mxu0 0.0
        %255 = vmatpush1.msra.mxu0 0.0
        %256 = vmatprep.subr.mxu0 0.0
        %257 = vmatpush1.msra.mxu0 0.0
        %258 = vmatprep.subr.mxu0 0.0
        %259 = vmatpush1.msra.mxu0 0.0
        %260 = vmatprep.subr.mxu0 0.0
        %261 = vmatpush1.msra.mxu0 0.0
        %262 = vmatprep.subr.mxu0 0.0
        %263 = vmatpush1.msra.mxu0 0.0
        %264 = vmatprep.subr.mxu0 0.0
        %265 = vmatpush1.msra.mxu0 0.0
        %266 = vmatprep.subr.mxu0 0.0
        %267 = vmatpush1.msra.mxu0 0.0
        %268 = vmatprep.subr.mxu0 0.0
        %269 = vmatpush1.msra.mxu0 0.0
        %270 = vmatprep.mubr.f32.mxu0 0.0
        %v271 = vand.u32 %v199, 4294901760
        %v272 = vsub.f32 %v199, %v271
        %v273 = vand.u32 %v272, 4294901760
        %v274 = vsub.f32 %v272, %v273
        %v275 = vand.u32 %v274, 4294901760
        %276 = vmatmul.mubr.f32.gmra.mrb[0].mxu0 %v275
        %v277 = vpop.f32.mrb[0].mxu0
        %v278 = vadd.f32 0.0, %v277
        %v279 = vpop.f32.mrb[0].mxu0
        %280 = vmatprep.mubr.f32.mxu0 0.0
        %v281 = vand.u32 %v202, 4294901760
        %v282 = vsub.f32 %v202, %v281
        %v283 = vand.u32 %v282, 4294901760
        %v284 = vsub.f32 %v282, %v283
        %v285 = vand.u32 %v284, 4294901760
        %286 = vmatmul.mubr.f32.gmra.mrb[0].mxu0 %v285
        %v287 = vpop.f32.mrb[0].mxu0
        %v288 = vadd.f32 0.0, %v287
        %v289 = vpop.f32.mrb[0].mxu0
        %290 = vdwg.mxu0
        %291 = vmatprep.subr.mxu0 0.0
        %v292 = vand.u32 %v193, 4294901760
        %v293 = vsub.f32 %v193, %v292
        %v294 = vand.u32 %v293, 4294901760
        %v295 = vsub.f32 %v293, %v294
        %v296 = vand.u32 %v295, 4294901760
        %297 = vmatpush1.msra.mxu0 %v296
        %298 = vmatprep.subr.mxu0 0.0
        %v299 = vand.u32 %v194, 4294901760
        %v300 = vsub.f32 %v194, %v299
        %v301 = vand.u32 %v300, 4294901760
        %v302 = vsub.f32 %v300, %v301
        %v303 = vand.u32 %v302, 4294901760
        %304 = vmatpush1.msra.mxu0 %v303
        %305 = vmatprep.subr.mxu0 0.0
        %306 = vmatpush1.msra.mxu0 0.0
        %307 = vmatprep.subr.mxu0 0.0
        %308 = vmatpush1.msra.mxu0 0.0
        %309 = vmatprep.subr.mxu0 0.0
        %310 = vmatpush1.msra.mxu0 0.0
        %311 = vmatprep.subr.mxu0 0.0
        %312 = vmatpush1.msra.mxu0 0.0
        %313 = vmatprep.subr.mxu0 0.0
        %314 = vmatpush1.msra.mxu0 0.0
        %315 = vmatprep.subr.mxu0 0.0
        %316 = vmatpush1.msra.mxu0 0.0
        %317 = vmatprep.subr.mxu0 0.0
        %318 = vmatpush1.msra.mxu0 0.0
        %319 = vmatprep.subr.mxu0 0.0
        %320 = vmatpush1.msra.mxu0 0.0
        %321 = vmatprep.subr.mxu0 0.0
        %322 = vmatpush1.msra.mxu0 0.0
        %323 = vmatprep.subr.mxu0 0.0
        %324 = vmatpush1.msra.mxu0 0.0
        %325 = vmatprep.subr.mxu0 0.0
        %326 = vmatpush1.msra.mxu0 0.0
        %327 = vmatprep.subr.mxu0 0.0
        %328 = vmatpush1.msra.mxu0 0.0
        %329 = vmatprep.subr.mxu0 0.0
        %330 = vmatpush1.msra.mxu0 0.0
        %331 = vmatprep.subr.mxu0 0.0
        %332 = vmatpush1.msra.mxu0 0.0
        %333 = vmatprep.subr.mxu0 0.0
        %334 = vmatpush1.msra.mxu0 0.0
        %335 = vmatprep.subr.mxu0 0.0
        %336 = vmatpush1.msra.mxu0 0.0
        %337 = vmatprep.subr.mxu0 0.0
        %338 = vmatpush1.msra.mxu0 0.0
        %339 = vmatprep.subr.mxu0 0.0
        %340 = vmatpush1.msra.mxu0 0.0
        %341 = vmatprep.subr.mxu0 0.0
        %342 = vmatpush1.msra.mxu0 0.0
        %343 = vmatprep.subr.mxu0 0.0
        %344 = vmatpush1.msra.mxu0 0.0
        %345 = vmatprep.subr.mxu0 0.0
        %346 = vmatpush1.msra.mxu0 0.0
        %347 = vmatprep.subr.mxu0 0.0
        %348 = vmatpush1.msra.mxu0 0.0
        %349 = vmatprep.subr.mxu0 0.0
        %350 = vmatpush1.msra.mxu0 0.0
        %351 = vmatprep.subr.mxu0 0.0
        %352 = vmatpush1.msra.mxu0 0.0
        %353 = vmatprep.subr.mxu0 0.0
        %354 = vmatpush1.msra.mxu0 0.0
        %355 = vmatprep.subr.mxu0 0.0
        %356 = vmatpush1.msra.mxu0 0.0
        %357 = vmatprep.subr.mxu0 0.0
        %358 = vmatpush1.msra.mxu0 0.0
        %359 = vmatprep.subr.mxu0 0.0
        %360 = vmatpush1.msra.mxu0 0.0
        %361 = vmatprep.subr.mxu0 0.0
        %362 = vmatpush1.msra.mxu0 0.0
        %363 = vmatprep.subr.mxu0 0.0
        %364 = vmatpush1.msra.mxu0 0.0
        %365 = vmatprep.mubr.f32.mxu0 0.0
        %v366 = vand.u32 %v199, 4294901760
        %367 = vmatmul.mubr.f32.gmra.mrb[0].mxu0 %v366
        %v368 = vpop.f32.mrb[0].mxu0
        %v369 = vadd.f32 %v278, %v368
        %v370 = vpop.f32.mrb[0].mxu0
        %371 = vmatprep.mubr.f32.mxu0 0.0
        %v372 = vand.u32 %v202, 4294901760
        %373 = vmatmul.mubr.f32.gmra.mrb[0].mxu0 %v372
        %v374 = vpop.f32.mrb[0].mxu0
        %v375 = vadd.f32 %v288, %v374
        %v376 = vpop.f32.mrb[0].mxu0
        %377 = vdwg.mxu0
        %378 = vmatprep.subr.mxu0 0.0
        %v379 = vand.u32 %v193, 4294901760
        %v380 = vsub.f32 %v193, %v379
        %381 = vmatpush1.msra.mxu0 %v380
        %382 = vmatprep.subr.mxu0 0.0
        %v383 = vand.u32 %v194, 4294901760
        %v384 = vsub.f32 %v194, %v383
        %385 = vmatpush1.msra.mxu0 %v384
        %386 = vmatprep.subr.mxu0 0.0
        %387 = vmatpush1.msra.mxu0 0.0
        %388 = vmatprep.subr.mxu0 0.0
        %389 = vmatpush1.msra.mxu0 0.0
        %390 = vmatprep.subr.mxu0 0.0
        %391 = vmatpush1.msra.mxu0 0.0
        %392 = vmatprep.subr.mxu0 0.0
        %393 = vmatpush1.msra.mxu0 0.0
        %394 = vmatprep.subr.mxu0 0.0
        %395 = vmatpush1.msra.mxu0 0.0
        %396 = vmatprep.subr.mxu0 0.0
        %397 = vmatpush1.msra.mxu0 0.0
        %398 = vmatprep.subr.mxu0 0.0
        %399 = vmatpush1.msra.mxu0 0.0
        %400 = vmatprep.subr.mxu0 0.0
        %401 = vmatpush1.msra.mxu0 0.0
        %402 = vmatprep.subr.mxu0 0.0
        %403 = vmatpush1.msra.mxu0 0.0
        %404 = vmatprep.subr.mxu0 0.0
        %405 = vmatpush1.msra.mxu0 0.0
        %406 = vmatprep.subr.mxu0 0.0
        %407 = vmatpush1.msra.mxu0 0.0
        %408 = vmatprep.subr.mxu0 0.0
        %409 = vmatpush1.msra.mxu0 0.0
        %410 = vmatprep.subr.mxu0 0.0
        %411 = vmatpush1.msra.mxu0 0.0
        %412 = vmatprep.subr.mxu0 0.0
        %413 = vmatpush1.msra.mxu0 0.0
        %414 = vmatprep.subr.mxu0 0.0
        %415 = vmatpush1.msra.mxu0 0.0
        %416 = vmatprep.subr.mxu0 0.0
        %417 = vmatpush1.msra.mxu0 0.0
        %418 = vmatprep.subr.mxu0 0.0
        %419 = vmatpush1.msra.mxu0 0.0
        %420 = vmatprep.subr.mxu0 0.0
        %421 = vmatpush1.msra.mxu0 0.0
        %422 = vmatprep.subr.mxu0 0.0
        %423 = vmatpush1.msra.mxu0 0.0
        %424 = vmatprep.subr.mxu0 0.0
        %425 = vmatpush1.msra.mxu0 0.0
        %426 = vmatprep.subr.mxu0 0.0
        %427 = vmatpush1.msra.mxu0 0.0
        %428 = vmatprep.subr.mxu0 0.0
        %429 = vmatpush1.msra.mxu0 0.0
        %430 = vmatprep.subr.mxu0 0.0
        %431 = vmatpush1.msra.mxu0 0.0
        %432 = vmatprep.subr.mxu0 0.0
        %433 = vmatpush1.msra.mxu0 0.0
        %434 = vmatprep.subr.mxu0 0.0
        %435 = vmatpush1.msra.mxu0 0.0
        %436 = vmatprep.subr.mxu0 0.0
        %437 = vmatpush1.msra.mxu0 0.0
        %438 = vmatprep.subr.mxu0 0.0
        %439 = vmatpush1.msra.mxu0 0.0
        %440 = vmatprep.subr.mxu0 0.0
        %441 = vmatpush1.msra.mxu0 0.0
        %442 = vmatprep.subr.mxu0 0.0
        %443 = vmatpush1.msra.mxu0 0.0
        %444 = vmatprep.subr.mxu0 0.0
        %445 = vmatpush1.msra.mxu0 0.0
        %446 = vmatprep.mubr.f32.mxu0 0.0
        %v447 = vand.u32 %v199, 4294901760
        %v448 = vsub.f32 %v199, %v447
        %449 = vmatmul.mubr.f32.gmra.mrb[0].mxu0 %v448
        %v450 = vpop.f32.mrb[0].mxu0
        %v451 = vadd.f32 %v369, %v450
        %v452 = vpop.f32.mrb[0].mxu0
        %453 = vmatprep.mubr.f32.mxu0 0.0
        %v454 = vand.u32 %v202, 4294901760
        %v455 = vsub.f32 %v202, %v454
        %456 = vmatmul.mubr.f32.gmra.mrb[0].mxu0 %v455
        %v457 = vpop.f32.mrb[0].mxu0
        %v458 = vadd.f32 %v375, %v457
        %v459 = vpop.f32.mrb[0].mxu0
        %460 = vdwg.mxu0
        %461 = vmatprep.subr.mxu0 0.0
        %v462 = vand.u32 %v193, 4294901760
        %463 = vmatpush1.msra.mxu0 %v462
        %464 = vmatprep.subr.mxu0 0.0
        %v465 = vand.u32 %v194, 4294901760
        %466 = vmatpush1.msra.mxu0 %v465
        %467 = vmatprep.subr.mxu0 0.0
        %468 = vmatpush1.msra.mxu0 0.0
        %469 = vmatprep.subr.mxu0 0.0
        %470 = vmatpush1.msra.mxu0 0.0
        %471 = vmatprep.subr.mxu0 0.0
        %472 = vmatpush1.msra.mxu0 0.0
        %473 = vmatprep.subr.mxu0 0.0
        %474 = vmatpush1.msra.mxu0 0.0
        %475 = vmatprep.subr.mxu0 0.0
        %476 = vmatpush1.msra.mxu0 0.0
        %477 = vmatprep.subr.mxu0 0.0
        %478 = vmatpush1.msra.mxu0 0.0
        %479 = vmatprep.subr.mxu0 0.0
        %480 = vmatpush1.msra.mxu0 0.0
        %481 = vmatprep.subr.mxu0 0.0
        %482 = vmatpush1.msra.mxu0 0.0
        %483 = vmatprep.subr.mxu0 0.0
        %484 = vmatpush1.msra.mxu0 0.0
        %485 = vmatprep.subr.mxu0 0.0
        %486 = vmatpush1.msra.mxu0 0.0
        %487 = vmatprep.subr.mxu0 0.0
        %488 = vmatpush1.msra.mxu0 0.0
        %489 = vmatprep.subr.mxu0 0.0
        %490 = vmatpush1.msra.mxu0 0.0
        %491 = vmatprep.subr.mxu0 0.0
        %492 = vmatpush1.msra.mxu0 0.0
        %493 = vmatprep.subr.mxu0 0.0
        %494 = vmatpush1.msra.mxu0 0.0
        %495 = vmatprep.subr.mxu0 0.0
        %496 = vmatpush1.msra.mxu0 0.0
        %497 = vmatprep.subr.mxu0 0.0
        %498 = vmatpush1.msra.mxu0 0.0
        %499 = vmatprep.subr.mxu0 0.0
        %500 = vmatpush1.msra.mxu0 0.0
        %501 = vmatprep.subr.mxu0 0.0
        %502 = vmatpush1.msra.mxu0 0.0
        %503 = vmatprep.subr.mxu0 0.0
        %504 = vmatpush1.msra.mxu0 0.0
        %505 = vmatprep.subr.mxu0 0.0
        %506 = vmatpush1.msra.mxu0 0.0
        %507 = vmatprep.subr.mxu0 0.0
        %508 = vmatpush1.msra.mxu0 0.0
        %509 = vmatprep.subr.mxu0 0.0
        %510 = vmatpush1.msra.mxu0 0.0
        %511 = vmatprep.subr.mxu0 0.0
        %512 = vmatpush1.msra.mxu0 0.0
        %513 = vmatprep.subr.mxu0 0.0
        %514 = vmatpush1.msra.mxu0 0.0
        %515 = vmatprep.subr.mxu0 0.0
        %516 = vmatpush1.msra.mxu0 0.0
        %517 = vmatprep.subr.mxu0 0.0
        %518 = vmatpush1.msra.mxu0 0.0
        %519 = vmatprep.subr.mxu0 0.0
        %520 = vmatpush1.msra.mxu0 0.0
        %521 = vmatprep.subr.mxu0 0.0
        %522 = vmatpush1.msra.mxu0 0.0
        %523 = vmatprep.subr.mxu0 0.0
        %524 = vmatpush1.msra.mxu0 0.0
        %525 = vmatprep.subr.mxu0 0.0
        %526 = vmatpush1.msra.mxu0 0.0
        %527 = vmatprep.mubr.f32.mxu0 0.0
        %v528 = vand.u32 %v199, 4294901760
        %v529 = vsub.f32 %v199, %v528
        %v530 = vand.u32 %v529, 4294901760
        %531 = vmatmul.mubr.f32.gmra.mrb[0].mxu0 %v530
        %v532 = vpop.f32.mrb[0].mxu0
        %v533 = vadd.f32 %v451, %v532
        %v534 = vpop.f32.mrb[0].mxu0
        %535 = vmatprep.mubr.f32.mxu0 0.0
        %v536 = vand.u32 %v202, 4294901760
        %v537 = vsub.f32 %v202, %v536
        %v538 = vand.u32 %v537, 4294901760
        %539 = vmatmul.mubr.f32.gmra.mrb[0].mxu0 %v538
        %v540 = vpop.f32.mrb[0].mxu0
        %v541 = vadd.f32 %v458, %v540
        %v542 = vpop.f32.mrb[0].mxu0
        %543 = vdwg.mxu0
        %544 = vmatprep.subr.mxu0 0.0
        %v545 = vand.u32 %v193, 4294901760
        %v546 = vsub.f32 %v193, %v545
        %v547 = vand.u32 %v546, 4294901760
        %548 = vmatpush1.msra.mxu0 %v547
        %549 = vmatprep.subr.mxu0 0.0
        %v550 = vand.u32 %v194, 4294901760
        %v551 = vsub.f32 %v194, %v550
        %v552 = vand.u32 %v551, 4294901760
        %553 = vmatpush1.msra.mxu0 %v552
        %554 = vmatprep.subr.mxu0 0.0
        %555 = vmatpush1.msra.mxu0 0.0
        %556 = vmatprep.subr.mxu0 0.0
        %557 = vmatpush1.msra.mxu0 0.0
        %558 = vmatprep.subr.mxu0 0.0
        %559 = vmatpush1.msra.mxu0 0.0
        %560 = vmatprep.subr.mxu0 0.0
        %561 = vmatpush1.msra.mxu0 0.0
        %562 = vmatprep.subr.mxu0 0.0
        %563 = vmatpush1.msra.mxu0 0.0
        %564 = vmatprep.subr.mxu0 0.0
        %565 = vmatpush1.msra.mxu0 0.0
        %566 = vmatprep.subr.mxu0 0.0
        %567 = vmatpush1.msra.mxu0 0.0
        %568 = vmatprep.subr.mxu0 0.0
        %569 = vmatpush1.msra.mxu0 0.0
        %570 = vmatprep.subr.mxu0 0.0
        %571 = vmatpush1.msra.mxu0 0.0
        %572 = vmatprep.subr.mxu0 0.0
        %573 = vmatpush1.msra.mxu0 0.0
        %574 = vmatprep.subr.mxu0 0.0
        %575 = vmatpush1.msra.mxu0 0.0
        %576 = vmatprep.subr.mxu0 0.0
        %577 = vmatpush1.msra.mxu0 0.0
        %578 = vmatprep.subr.mxu0 0.0
        %579 = vmatpush1.msra.mxu0 0.0
        %580 = vmatprep.subr.mxu0 0.0
        %581 = vmatpush1.msra.mxu0 0.0
        %582 = vmatprep.subr.mxu0 0.0
        %583 = vmatpush1.msra.mxu0 0.0
        %584 = vmatprep.subr.mxu0 0.0
        %585 = vmatpush1.msra.mxu0 0.0
        %586 = vmatprep.subr.mxu0 0.0
        %587 = vmatpush1.msra.mxu0 0.0
        %588 = vmatprep.subr.mxu0 0.0
        %589 = vmatpush1.msra.mxu0 0.0
        %590 = vmatprep.subr.mxu0 0.0
        %591 = vmatpush1.msra.mxu0 0.0
        %592 = vmatprep.subr.mxu0 0.0
        %593 = vmatpush1.msra.mxu0 0.0
        %594 = vmatprep.subr.mxu0 0.0
        %595 = vmatpush1.msra.mxu0 0.0
        %596 = vmatprep.subr.mxu0 0.0
        %597 = vmatpush1.msra.mxu0 0.0
        %598 = vmatprep.subr.mxu0 0.0
        %599 = vmatpush1.msra.mxu0 0.0
        %600 = vmatprep.subr.mxu0 0.0
        %601 = vmatpush1.msra.mxu0 0.0
        %602 = vmatprep.subr.mxu0 0.0
        %603 = vmatpush1.msra.mxu0 0.0
        %604 = vmatprep.subr.mxu0 0.0
        %605 = vmatpush1.msra.mxu0 0.0
        %606 = vmatprep.subr.mxu0 0.0
        %607 = vmatpush1.msra.mxu0 0.0
        %608 = vmatprep.subr.mxu0 0.0
        %609 = vmatpush1.msra.mxu0 0.0
        %610 = vmatprep.subr.mxu0 0.0
        %611 = vmatpush1.msra.mxu0 0.0
        %612 = vmatprep.subr.mxu0 0.0
        %613 = vmatpush1.msra.mxu0 0.0
        %614 = vmatprep.mubr.f32.mxu0 0.0
        %v615 = vand.u32 %v199, 4294901760
        %616 = vmatmul.mubr.f32.gmra.mrb[0].mxu0 %v615
        %v617 = vpop.f32.mrb[0].mxu0
        %v618 = vadd.f32 %v533, %v617
        %v619 = vpop.f32.mrb[0].mxu0
        %620 = vmatprep.mubr.f32.mxu0 0.0
        %v621 = vand.u32 %v202, 4294901760
        %622 = vmatmul.mubr.f32.gmra.mrb[0].mxu0 %v621
        %v623 = vpop.f32.mrb[0].mxu0
        %v624 = vadd.f32 %v541, %v623
        %v625 = vpop.f32.mrb[0].mxu0
        %626 = vdwg.mxu0
        %627 = vmatprep.subr.mxu0 0.0
        %v628 = vand.u32 %v193, 4294901760
        %629 = vmatpush1.msra.mxu0 %v628
        %630 = vmatprep.subr.mxu0 0.0
        %v631 = vand.u32 %v194, 4294901760
        %632 = vmatpush1.msra.mxu0 %v631
        %633 = vmatprep.subr.mxu0 0.0
        %634 = vmatpush1.msra.mxu0 0.0
        %635 = vmatprep.subr.mxu0 0.0
        %636 = vmatpush1.msra.mxu0 0.0
        %637 = vmatprep.subr.mxu0 0.0
        %638 = vmatpush1.msra.mxu0 0.0
        %639 = vmatprep.subr.mxu0 0.0
        %640 = vmatpush1.msra.mxu0 0.0
        %641 = vmatprep.subr.mxu0 0.0
        %642 = vmatpush1.msra.mxu0 0.0
        %643 = vmatprep.subr.mxu0 0.0
        %644 = vmatpush1.msra.mxu0 0.0
        %645 = vmatprep.subr.mxu0 0.0
        %646 = vmatpush1.msra.mxu0 0.0
        %647 = vmatprep.subr.mxu0 0.0
        %648 = vmatpush1.msra.mxu0 0.0
        %649 = vmatprep.subr.mxu0 0.0
        %650 = vmatpush1.msra.mxu0 0.0
        %651 = vmatprep.subr.mxu0 0.0
        %652 = vmatpush1.msra.mxu0 0.0
        %653 = vmatprep.subr.mxu0 0.0
        %654 = vmatpush1.msra.mxu0 0.0
        %655 = vmatprep.subr.mxu0 0.0
        %656 = vmatpush1.msra.mxu0 0.0
        %657 = vmatprep.subr.mxu0 0.0
        %658 = vmatpush1.msra.mxu0 0.0
        %659 = vmatprep.subr.mxu0 0.0
        %660 = vmatpush1.msra.mxu0 0.0
        %661 = vmatprep.subr.mxu0 0.0
        %662 = vmatpush1.msra.mxu0 0.0
        %663 = vmatprep.subr.mxu0 0.0
        %664 = vmatpush1.msra.mxu0 0.0
        %665 = vmatprep.subr.mxu0 0.0
        %666 = vmatpush1.msra.mxu0 0.0
        %667 = vmatprep.subr.mxu0 0.0
        %668 = vmatpush1.msra.mxu0 0.0
        %669 = vmatprep.subr.mxu0 0.0
        %670 = vmatpush1.msra.mxu0 0.0
        %671 = vmatprep.subr.mxu0 0.0
        %672 = vmatpush1.msra.mxu0 0.0
        %673 = vmatprep.subr.mxu0 0.0
        %674 = vmatpush1.msra.mxu0 0.0
        %675 = vmatprep.subr.mxu0 0.0
        %676 = vmatpush1.msra.mxu0 0.0
        %677 = vmatprep.subr.mxu0 0.0
        %678 = vmatpush1.msra.mxu0 0.0
        %679 = vmatprep.subr.mxu0 0.0
        %680 = vmatpush1.msra.mxu0 0.0
        %681 = vmatprep.subr.mxu0 0.0
        %682 = vmatpush1.msra.mxu0 0.0
        %683 = vmatprep.subr.mxu0 0.0
        %684 = vmatpush1.msra.mxu0 0.0
        %685 = vmatprep.subr.mxu0 0.0
        %686 = vmatpush1.msra.mxu0 0.0
        %687 = vmatprep.subr.mxu0 0.0
        %688 = vmatpush1.msra.mxu0 0.0
        %689 = vmatprep.subr.mxu0 0.0
        %690 = vmatpush1.msra.mxu0 0.0
        %691 = vmatprep.subr.mxu0 0.0
        %692 = vmatpush1.msra.mxu0 0.0
        %693 = vmatprep.mubr.f32.mxu0 0.0
        %v694 = vand.u32 %v199, 4294901760
        %695 = vmatmul.mubr.f32.gmra.mrb[0].mxu0 %v694
        %v696 = vpop.f32.mrb[0].mxu0
        %v697 = vadd.f32 %v618, %v696
        %v698 = vpop.f32.mrb[0].mxu0
        %699 = vmatprep.mubr.f32.mxu0 0.0
        %v700 = vand.u32 %v202, 4294901760
        %701 = vmatmul.mubr.f32.gmra.mrb[0].mxu0 %v700
        %v702 = vpop.f32.mrb[0].mxu0
        %v703 = vadd.f32 %v624, %v702
        %v704 = vpop.f32.mrb[0].mxu0
        %705 = vdwg.mxu0
        %vm706 = vcmask 64512
        %707 = vst.msk [vmem:[%s190] sm:$0xff] %vm706, %v697
        %708 = vst.msk [vmem:[%s190 + $0x8] sm:$0xff] %vm706, %v703
        %711 = vrot.lane.b32.xlu0 %v697, 120
        %v712 = vpop.permute.xlu0 %711
        %713 = vrot.lane.b32.xlu0 %v703, 120
        %v714 = vpop.permute.xlu0 %713
        %s717 = scalar_lea.vmem %s190, 16 [#allocation6]
        %718 = vst.msk [vmem:[%s717] sm:$0xff] %vm706, %v712
        %719 = vst.msk [vmem:[%s717 + $0x8] sm:$0xff] %vm706, %v714
        %v720 = vld [vmem:[%s167] sm:$0xff]
        %v721 = vld [vmem:[%s167 + $0x8] sm:$0xff]
        %724 = vrot.lane.b32.xlu0 %v720, 112
        %v725 = vpop.permute.xlu0 %724
        %726 = vrot.lane.b32.xlu0 %v721, 112
        %v727 = vpop.permute.xlu0 %726
        %v728 = vsel %vm197, %v725, 0
        %v730 = vsel %vm197, %v727, 0
        %732 = vmatprep.subr.mxu0 0.0
        %v733 = vand.u32 %v193, 4294901760
        %734 = vmatpush1.msra.mxu0 %v733
        %735 = vmatprep.subr.mxu0 0.0
        %v736 = vand.u32 %v194, 4294901760
        %737 = vmatpush1.msra.mxu0 %v736
        %738 = vmatprep.subr.mxu0 0.0
        %739 = vmatpush1.msra.mxu0 0.0
        %740 = vmatprep.subr.mxu0 0.0
        %741 = vmatpush1.msra.mxu0 0.0
        %742 = vmatprep.subr.mxu0 0.0
        %743 = vmatpush1.msra.mxu0 0.0
        %744 = vmatprep.subr.mxu0 0.0
        %745 = vmatpush1.msra.mxu0 0.0
        %746 = vmatprep.subr.mxu0 0.0
        %747 = vmatpush1.msra.mxu0 0.0
        %748 = vmatprep.subr.mxu0 0.0
        %749 = vmatpush1.msra.mxu0 0.0
        %750 = vmatprep.subr.mxu0 0.0
        %751 = vmatpush1.msra.mxu0 0.0
        %752 = vmatprep.subr.mxu0 0.0
        %753 = vmatpush1.msra.mxu0 0.0
        %754 = vmatprep.subr.mxu0 0.0
        %755 = vmatpush1.msra.mxu0 0.0
        %756 = vmatprep.subr.mxu0 0.0
        %757 = vmatpush1.msra.mxu0 0.0
        %758 = vmatprep.subr.mxu0 0.0
        %759 = vmatpush1.msra.mxu0 0.0
        %760 = vmatprep.subr.mxu0 0.0
        %761 = vmatpush1.msra.mxu0 0.0
        %762 = vmatprep.subr.mxu0 0.0
        %763 = vmatpush1.msra.mxu0 0.0
        %764 = vmatprep.subr.mxu0 0.0
        %765 = vmatpush1.msra.mxu0 0.0
        %766 = vmatprep.subr.mxu0 0.0
        %767 = vmatpush1.msra.mxu0 0.0
        %768 = vmatprep.subr.mxu0 0.0
        %769 = vmatpush1.msra.mxu0 0.0
        %770 = vmatprep.subr.mxu0 0.0
        %771 = vmatpush1.msra.mxu0 0.0
        %772 = vmatprep.subr.mxu0 0.0
        %773 = vmatpush1.msra.mxu0 0.0
        %774 = vmatprep.subr.mxu0 0.0
        %775 = vmatpush1.msra.mxu0 0.0
        %776 = vmatprep.subr.mxu0 0.0
        %777 = vmatpush1.msra.mxu0 0.0
        %778 = vmatprep.subr.mxu0 0.0
        %779 = vmatpush1.msra.mxu0 0.0
        %780 = vmatprep.subr.mxu0 0.0
        %781 = vmatpush1.msra.mxu0 0.0
        %782 = vmatprep.subr.mxu0 0.0
        %783 = vmatpush1.msra.mxu0 0.0
        %784 = vmatprep.subr.mxu0 0.0
        %785 = vmatpush1.msra.mxu0 0.0
        %786 = vmatprep.subr.mxu0 0.0
        %787 = vmatpush1.msra.mxu0 0.0
        %788 = vmatprep.subr.mxu0 0.0
        %789 = vmatpush1.msra.mxu0 0.0
        %790 = vmatprep.subr.mxu0 0.0
        %791 = vmatpush1.msra.mxu0 0.0
        %792 = vmatprep.subr.mxu0 0.0
        %793 = vmatpush1.msra.mxu0 0.0
        %794 = vmatprep.subr.mxu0 0.0
        %795 = vmatpush1.msra.mxu0 0.0
        %796 = vmatprep.subr.mxu0 0.0
        %797 = vmatpush1.msra.mxu0 0.0
        %798 = vmatprep.mubr.f32.mxu0 0.0
        %v799 = vand.u32 %v728, 4294901760
        %v800 = vsub.f32 %v728, %v799
        %v801 = vand.u32 %v800, 4294901760
        %v802 = vsub.f32 %v800, %v801
        %v803 = vand.u32 %v802, 4294901760
        %804 = vmatmul.mubr.f32.gmra.mrb[0].mxu0 %v803
        %v805 = vpop.f32.mrb[0].mxu0
        %v806 = vadd.f32 0.0, %v805
        %v807 = vpop.f32.mrb[0].mxu0
        %808 = vmatprep.mubr.f32.mxu0 0.0
        %v809 = vand.u32 %v730, 4294901760
        %v810 = vsub.f32 %v730, %v809
        %v811 = vand.u32 %v810, 4294901760
        %v812 = vsub.f32 %v810, %v811
        %v813 = vand.u32 %v812, 4294901760
        %814 = vmatmul.mubr.f32.gmra.mrb[0].mxu0 %v813
        %v815 = vpop.f32.mrb[0].mxu0
        %v816 = vadd.f32 0.0, %v815
        %v817 = vpop.f32.mrb[0].mxu0
        %818 = vdwg.mxu0
        %819 = vmatprep.subr.mxu0 0.0
        %v820 = vand.u32 %v193, 4294901760
        %v821 = vsub.f32 %v193, %v820
        %v822 = vand.u32 %v821, 4294901760
        %v823 = vsub.f32 %v821, %v822
        %v824 = vand.u32 %v823, 4294901760
        %825 = vmatpush1.msra.mxu0 %v824
        %826 = vmatprep.subr.mxu0 0.0
        %v827 = vand.u32 %v194, 4294901760
        %v828 = vsub.f32 %v194, %v827
        %v829 = vand.u32 %v828, 4294901760
        %v830 = vsub.f32 %v828, %v829
        %v831 = vand.u32 %v830, 4294901760
        %832 = vmatpush1.msra.mxu0 %v831
        %833 = vmatprep.subr.mxu0 0.0
        %834 = vmatpush1.msra.mxu0 0.0
        %835 = vmatprep.subr.mxu0 0.0
        %836 = vmatpush1.msra.mxu0 0.0
        %837 = vmatprep.subr.mxu0 0.0
        %838 = vmatpush1.msra.mxu0 0.0
        %839 = vmatprep.subr.mxu0 0.0
        %840 = vmatpush1.msra.mxu0 0.0
        %841 = vmatprep.subr.mxu0 0.0
        %842 = vmatpush1.msra.mxu0 0.0
        %843 = vmatprep.subr.mxu0 0.0
        %844 = vmatpush1.msra.mxu0 0.0
        %845 = vmatprep.subr.mxu0 0.0
        %846 = vmatpush1.msra.mxu0 0.0
        %847 = vmatprep.subr.mxu0 0.0
        %848 = vmatpush1.msra.mxu0 0.0
        %849 = vmatprep.subr.mxu0 0.0
        %850 = vmatpush1.msra.mxu0 0.0
        %851 = vmatprep.subr.mxu0 0.0
        %852 = vmatpush1.msra.mxu0 0.0
        %853 = vmatprep.subr.mxu0 0.0
        %854 = vmatpush1.msra.mxu0 0.0
        %855 = vmatprep.subr.mxu0 0.0
        %856 = vmatpush1.msra.mxu0 0.0
        %857 = vmatprep.subr.mxu0 0.0
        %858 = vmatpush1.msra.mxu0 0.0
        %859 = vmatprep.subr.mxu0 0.0
        %860 = vmatpush1.msra.mxu0 0.0
        %861 = vmatprep.subr.mxu0 0.0
        %862 = vmatpush1.msra.mxu0 0.0
        %863 = vmatprep.subr.mxu0 0.0
        %864 = vmatpush1.msra.mxu0 0.0
        %865 = vmatprep.subr.mxu0 0.0
        %866 = vmatpush1.msra.mxu0 0.0
        %867 = vmatprep.subr.mxu0 0.0
        %868 = vmatpush1.msra.mxu0 0.0
        %869 = vmatprep.subr.mxu0 0.0
        %870 = vmatpush1.msra.mxu0 0.0
        %871 = vmatprep.subr.mxu0 0.0
        %872 = vmatpush1.msra.mxu0 0.0
        %873 = vmatprep.subr.mxu0 0.0
        %874 = vmatpush1.msra.mxu0 0.0
        %875 = vmatprep.subr.mxu0 0.0
        %876 = vmatpush1.msra.mxu0 0.0
        %877 = vmatprep.subr.mxu0 0.0
        %878 = vmatpush1.msra.mxu0 0.0
        %879 = vmatprep.subr.mxu0 0.0
        %880 = vmatpush1.msra.mxu0 0.0
        %881 = vmatprep.subr.mxu0 0.0
        %882 = vmatpush1.msra.mxu0 0.0
        %883 = vmatprep.subr.mxu0 0.0
        %884 = vmatpush1.msra.mxu0 0.0
        %885 = vmatprep.subr.mxu0 0.0
        %886 = vmatpush1.msra.mxu0 0.0
        %887 = vmatprep.subr.mxu0 0.0
        %888 = vmatpush1.msra.mxu0 0.0
        %889 = vmatprep.subr.mxu0 0.0
        %890 = vmatpush1.msra.mxu0 0.0
        %891 = vmatprep.subr.mxu0 0.0
        %892 = vmatpush1.msra.mxu0 0.0
        %893 = vmatprep.mubr.f32.mxu0 0.0
        %v894 = vand.u32 %v728, 4294901760
        %895 = vmatmul.mubr.f32.gmra.mrb[0].mxu0 %v894
        %v896 = vpop.f32.mrb[0].mxu0
        %v897 = vadd.f32 %v806, %v896
        %v898 = vpop.f32.mrb[0].mxu0
        %899 = vmatprep.mubr.f32.mxu0 0.0
        %v900 = vand.u32 %v730, 4294901760
        %901 = vmatmul.mubr.f32.gmra.mrb[0].mxu0 %v900
        %v902 = vpop.f32.mrb[0].mxu0
        %v903 = vadd.f32 %v816, %v902
        %v904 = vpop.f32.mrb[0].mxu0
        %905 = vdwg.mxu0
        %906 = vmatprep.subr.mxu0 0.0
        %v907 = vand.u32 %v193, 4294901760
        %v908 = vsub.f32 %v193, %v907
        %909 = vmatpush1.msra.mxu0 %v908
        %910 = vmatprep.subr.mxu0 0.0
        %v911 = vand.u32 %v194, 4294901760
        %v912 = vsub.f32 %v194, %v911
        %913 = vmatpush1.msra.mxu0 %v912
        %914 = vmatprep.subr.mxu0 0.0
        %915 = vmatpush1.msra.mxu0 0.0
        %916 = vmatprep.subr.mxu0 0.0
        %917 = vmatpush1.msra.mxu0 0.0
        %918 = vmatprep.subr.mxu0 0.0
        %919 = vmatpush1.msra.mxu0 0.0
        %920 = vmatprep.subr.mxu0 0.0
        %921 = vmatpush1.msra.mxu0 0.0
        %922 = vmatprep.subr.mxu0 0.0
        %923 = vmatpush1.msra.mxu0 0.0
        %924 = vmatprep.subr.mxu0 0.0
        %925 = vmatpush1.msra.mxu0 0.0
        %926 = vmatprep.subr.mxu0 0.0
        %927 = vmatpush1.msra.mxu0 0.0
        %928 = vmatprep.subr.mxu0 0.0
        %929 = vmatpush1.msra.mxu0 0.0
        %930 = vmatprep.subr.mxu0 0.0
        %931 = vmatpush1.msra.mxu0 0.0
        %932 = vmatprep.subr.mxu0 0.0
        %933 = vmatpush1.msra.mxu0 0.0
        %934 = vmatprep.subr.mxu0 0.0
        %935 = vmatpush1.msra.mxu0 0.0
        %936 = vmatprep.subr.mxu0 0.0
        %937 = vmatpush1.msra.mxu0 0.0
        %938 = vmatprep.subr.mxu0 0.0
        %939 = vmatpush1.msra.mxu0 0.0
        %940 = vmatprep.subr.mxu0 0.0
        %941 = vmatpush1.msra.mxu0 0.0
        %942 = vmatprep.subr.mxu0 0.0
        %943 = vmatpush1.msra.mxu0 0.0
        %944 = vmatprep.subr.mxu0 0.0
        %945 = vmatpush1.msra.mxu0 0.0
        %946 = vmatprep.subr.mxu0 0.0
        %947 = vmatpush1.msra.mxu0 0.0
        %948 = vmatprep.subr.mxu0 0.0
        %949 = vmatpush1.msra.mxu0 0.0
        %950 = vmatprep.subr.mxu0 0.0
        %951 = vmatpush1.msra.mxu0 0.0
        %952 = vmatprep.subr.mxu0 0.0
        %953 = vmatpush1.msra.mxu0 0.0
        %954 = vmatprep.subr.mxu0 0.0
        %955 = vmatpush1.msra.mxu0 0.0
        %956 = vmatprep.subr.mxu0 0.0
        %957 = vmatpush1.msra.mxu0 0.0
        %958 = vmatprep.subr.mxu0 0.0
        %959 = vmatpush1.msra.mxu0 0.0
        %960 = vmatprep.subr.mxu0 0.0
        %961 = vmatpush1.msra.mxu0 0.0
        %962 = vmatprep.subr.mxu0 0.0
        %963 = vmatpush1.msra.mxu0 0.0
        %964 = vmatprep.subr.mxu0 0.0
        %965 = vmatpush1.msra.mxu0 0.0
        %966 = vmatprep.subr.mxu0 0.0
        %967 = vmatpush1.msra.mxu0 0.0
        %968 = vmatprep.subr.mxu0 0.0
        %969 = vmatpush1.msra.mxu0 0.0
        %970 = vmatprep.subr.mxu0 0.0
        %971 = vmatpush1.msra.mxu0 0.0
        %972 = vmatprep.subr.mxu0 0.0
        %973 = vmatpush1.msra.mxu0 0.0
        %974 = vmatprep.mubr.f32.mxu0 0.0
        %v975 = vand.u32 %v728, 4294901760
        %v976 = vsub.f32 %v728, %v975
        %977 = vmatmul.mubr.f32.gmra.mrb[0].mxu0 %v976
        %v978 = vpop.f32.mrb[0].mxu0
        %v979 = vadd.f32 %v897, %v978
        %v980 = vpop.f32.mrb[0].mxu0
        %981 = vmatprep.mubr.f32.mxu0 0.0
        %v982 = vand.u32 %v730, 4294901760
        %v983 = vsub.f32 %v730, %v982
        %984 = vmatmul.mubr.f32.gmra.mrb[0].mxu0 %v983
        %v985 = vpop.f32.mrb[0].mxu0
        %v986 = vadd.f32 %v903, %v985
        %v987 = vpop.f32.mrb[0].mxu0
        %988 = vdwg.mxu0
        %989 = vmatprep.subr.mxu0 0.0
        %v990 = vand.u32 %v193, 4294901760
        %991 = vmatpush1.msra.mxu0 %v990
        %992 = vmatprep.subr.mxu0 0.0
        %v993 = vand.u32 %v194, 4294901760
        %994 = vmatpush1.msra.mxu0 %v993
        %995 = vmatprep.subr.mxu0 0.0
        %996 = vmatpush1.msra.mxu0 0.0
        %997 = vmatprep.subr.mxu0 0.0
        %998 = vmatpush1.msra.mxu0 0.0
        %999 = vmatprep.subr.mxu0 0.0
        %1000 = vmatpush1.msra.mxu0 0.0
        %1001 = vmatprep.subr.mxu0 0.0
        %1002 = vmatpush1.msra.mxu0 0.0
        %1003 = vmatprep.subr.mxu0 0.0
        %1004 = vmatpush1.msra.mxu0 0.0
        %1005 = vmatprep.subr.mxu0 0.0
        %1006 = vmatpush1.msra.mxu0 0.0
        %1007 = vmatprep.subr.mxu0 0.0
        %1008 = vmatpush1.msra.mxu0 0.0
        %1009 = vmatprep.subr.mxu0 0.0
        %1010 = vmatpush1.msra.mxu0 0.0
        %1011 = vmatprep.subr.mxu0 0.0
        %1012 = vmatpush1.msra.mxu0 0.0
        %1013 = vmatprep.subr.mxu0 0.0
        %1014 = vmatpush1.msra.mxu0 0.0
        %1015 = vmatprep.subr.mxu0 0.0
        %1016 = vmatpush1.msra.mxu0 0.0
        %1017 = vmatprep.subr.mxu0 0.0
        %1018 = vmatpush1.msra.mxu0 0.0
        %1019 = vmatprep.subr.mxu0 0.0
        %1020 = vmatpush1.msra.mxu0 0.0
        %1021 = vmatprep.subr.mxu0 0.0
        %1022 = vmatpush1.msra.mxu0 0.0
        %1023 = vmatprep.subr.mxu0 0.0
        %1024 = vmatpush1.msra.mxu0 0.0
        %1025 = vmatprep.subr.mxu0 0.0
        %1026 = vmatpush1.msra.mxu0 0.0
        %1027 = vmatprep.subr.mxu0 0.0
        %1028 = vmatpush1.msra.mxu0 0.0
        %1029 = vmatprep.subr.mxu0 0.0
        %1030 = vmatpush1.msra.mxu0 0.0
        %1031 = vmatprep.subr.mxu0 0.0
        %1032 = vmatpush1.msra.mxu0 0.0
        %1033 = vmatprep.subr.mxu0 0.0
        %1034 = vmatpush1.msra.mxu0 0.0
        %1035 = vmatprep.subr.mxu0 0.0
        %1036 = vmatpush1.msra.mxu0 0.0
        %1037 = vmatprep.subr.mxu0 0.0
        %1038 = vmatpush1.msra.mxu0 0.0
        %1039 = vmatprep.subr.mxu0 0.0
        %1040 = vmatpush1.msra.mxu0 0.0
        %1041 = vmatprep.subr.mxu0 0.0
        %1042 = vmatpush1.msra.mxu0 0.0
        %1043 = vmatprep.subr.mxu0 0.0
        %1044 = vmatpush1.msra.mxu0 0.0
        %1045 = vmatprep.subr.mxu0 0.0
        %1046 = vmatpush1.msra.mxu0 0.0
        %1047 = vmatprep.subr.mxu0 0.0
        %1048 = vmatpush1.msra.mxu0 0.0
        %1049 = vmatprep.subr.mxu0 0.0
        %1050 = vmatpush1.msra.mxu0 0.0
        %1051 = vmatprep.subr.mxu0 0.0
        %1052 = vmatpush1.msra.mxu0 0.0
        %1053 = vmatprep.subr.mxu0 0.0
        %1054 = vmatpush1.msra.mxu0 0.0
        %1055 = vmatprep.mubr.f32.mxu0 0.0
        %v1056 = vand.u32 %v728, 4294901760
        %v1057 = vsub.f32 %v728, %v1056
        %v1058 = vand.u32 %v1057, 4294901760
        %1059 = vmatmul.mubr.f32.gmra.mrb[0].mxu0 %v1058
        %v1060 = vpop.f32.mrb[0].mxu0
        %v1061 = vadd.f32 %v979, %v1060
        %v1062 = vpop.f32.mrb[0].mxu0
        %1063 = vmatprep.mubr.f32.mxu0 0.0
        %v1064 = vand.u32 %v730, 4294901760
        %v1065 = vsub.f32 %v730, %v1064
        %v1066 = vand.u32 %v1065, 4294901760
        %1067 = vmatmul.mubr.f32.gmra.mrb[0].mxu0 %v1066
        %v1068 = vpop.f32.mrb[0].mxu0
        %v1069 = vadd.f32 %v986, %v1068
        %v1070 = vpop.f32.mrb[0].mxu0
        %1071 = vdwg.mxu0
        %1072 = vmatprep.subr.mxu0 0.0
        %v1073 = vand.u32 %v193, 4294901760
        %v1074 = vsub.f32 %v193, %v1073
        %v1075 = vand.u32 %v1074, 4294901760
        %1076 = vmatpush1.msra.mxu0 %v1075
        %1077 = vmatprep.subr.mxu0 0.0
        %v1078 = vand.u32 %v194, 4294901760
        %v1079 = vsub.f32 %v194, %v1078
        %v1080 = vand.u32 %v1079, 4294901760
        %1081 = vmatpush1.msra.mxu0 %v1080
        %1082 = vmatprep.subr.mxu0 0.0
        %1083 = vmatpush1.msra.mxu0 0.0
        %1084 = vmatprep.subr.mxu0 0.0
        %1085 = vmatpush1.msra.mxu0 0.0
        %1086 = vmatprep.subr.mxu0 0.0
        %1087 = vmatpush1.msra.mxu0 0.0
        %1088 = vmatprep.subr.mxu0 0.0
        %1089 = vmatpush1.msra.mxu0 0.0
        %1090 = vmatprep.subr.mxu0 0.0
        %1091 = vmatpush1.msra.mxu0 0.0
        %1092 = vmatprep.subr.mxu0 0.0
        %1093 = vmatpush1.msra.mxu0 0.0
        %1094 = vmatprep.subr.mxu0 0.0
        %1095 = vmatpush1.msra.mxu0 0.0
        %1096 = vmatprep.subr.mxu0 0.0
        %1097 = vmatpush1.msra.mxu0 0.0
        %1098 = vmatprep.subr.mxu0 0.0
        %1099 = vmatpush1.msra.mxu0 0.0
        %1100 = vmatprep.subr.mxu0 0.0
        %1101 = vmatpush1.msra.mxu0 0.0
        %1102 = vmatprep.subr.mxu0 0.0
        %1103 = vmatpush1.msra.mxu0 0.0
        %1104 = vmatprep.subr.mxu0 0.0
        %1105 = vmatpush1.msra.mxu0 0.0
        %1106 = vmatprep.subr.mxu0 0.0
        %1107 = vmatpush1.msra.mxu0 0.0
        %1108 = vmatprep.subr.mxu0 0.0
        %1109 = vmatpush1.msra.mxu0 0.0
        %1110 = vmatprep.subr.mxu0 0.0
        %1111 = vmatpush1.msra.mxu0 0.0
        %1112 = vmatprep.subr.mxu0 0.0
        %1113 = vmatpush1.msra.mxu0 0.0
        %1114 = vmatprep.subr.mxu0 0.0
        %1115 = vmatpush1.msra.mxu0 0.0
        %1116 = vmatprep.subr.mxu0 0.0
        %1117 = vmatpush1.msra.mxu0 0.0
        %1118 = vmatprep.subr.mxu0 0.0
        %1119 = vmatpush1.msra.mxu0 0.0
        %1120 = vmatprep.subr.mxu0 0.0
        %1121 = vmatpush1.msra.mxu0 0.0
        %1122 = vmatprep.subr.mxu0 0.0
        %1123 = vmatpush1.msra.mxu0 0.0
        %1124 = vmatprep.subr.mxu0 0.0
        %1125 = vmatpush1.msra.mxu0 0.0
        %1126 = vmatprep.subr.mxu0 0.0
        %1127 = vmatpush1.msra.mxu0 0.0
        %1128 = vmatprep.subr.mxu0 0.0
        %1129 = vmatpush1.msra.mxu0 0.0
        %1130 = vmatprep.subr.mxu0 0.0
        %1131 = vmatpush1.msra.mxu0 0.0
        %1132 = vmatprep.subr.mxu0 0.0
        %1133 = vmatpush1.msra.mxu0 0.0
        %1134 = vmatprep.subr.mxu0 0.0
        %1135 = vmatpush1.msra.mxu0 0.0
        %1136 = vmatprep.subr.mxu0 0.0
        %1137 = vmatpush1.msra.mxu0 0.0
        %1138 = vmatprep.subr.mxu0 0.0
        %1139 = vmatpush1.msra.mxu0 0.0
        %1140 = vmatprep.subr.mxu0 0.0
        %1141 = vmatpush1.msra.mxu0 0.0
        %1142 = vmatprep.mubr.f32.mxu0 0.0
        %v1143 = vand.u32 %v728, 4294901760
        %1144 = vmatmul.mubr.f32.gmra.mrb[0].mxu0 %v1143
        %v1145 = vpop.f32.mrb[0].mxu0
        %v1146 = vadd.f32 %v1061, %v1145
        %v1147 = vpop.f32.mrb[0].mxu0
        %1148 = vmatprep.mubr.f32.mxu0 0.0
        %v1149 = vand.u32 %v730, 4294901760
        %1150 = vmatmul.mubr.f32.gmra.mrb[0].mxu0 %v1149
        %v1151 = vpop.f32.mrb[0].mxu0
        %v1152 = vadd.f32 %v1069, %v1151
        %v1153 = vpop.f32.mrb[0].mxu0
        %1154 = vdwg.mxu0
        %1155 = vmatprep.subr.mxu0 0.0
        %v1156 = vand.u32 %v193, 4294901760
        %1157 = vmatpush1.msra.mxu0 %v1156
        %1158 = vmatprep.subr.mxu0 0.0
        %v1159 = vand.u32 %v194, 4294901760
        %1160 = vmatpush1.msra.mxu0 %v1159
        %1161 = vmatprep.subr.mxu0 0.0
        %1162 = vmatpush1.msra.mxu0 0.0
        %1163 = vmatprep.subr.mxu0 0.0
        %1164 = vmatpush1.msra.mxu0 0.0
        %1165 = vmatprep.subr.mxu0 0.0
        %1166 = vmatpush1.msra.mxu0 0.0
        %1167 = vmatprep.subr.mxu0 0.0
        %1168 = vmatpush1.msra.mxu0 0.0
        %1169 = vmatprep.subr.mxu0 0.0
        %1170 = vmatpush1.msra.mxu0 0.0
        %1171 = vmatprep.subr.mxu0 0.0
        %1172 = vmatpush1.msra.mxu0 0.0
        %1173 = vmatprep.subr.mxu0 0.0
        %1174 = vmatpush1.msra.mxu0 0.0
        %1175 = vmatprep.subr.mxu0 0.0
        %1176 = vmatpush1.msra.mxu0 0.0
        %1177 = vmatprep.subr.mxu0 0.0
        %1178 = vmatpush1.msra.mxu0 0.0
        %1179 = vmatprep.subr.mxu0 0.0
        %1180 = vmatpush1.msra.mxu0 0.0
        %1181 = vmatprep.subr.mxu0 0.0
        %1182 = vmatpush1.msra.mxu0 0.0
        %1183 = vmatprep.subr.mxu0 0.0
        %1184 = vmatpush1.msra.mxu0 0.0
        %1185 = vmatprep.subr.mxu0 0.0
        %1186 = vmatpush1.msra.mxu0 0.0
        %1187 = vmatprep.subr.mxu0 0.0
        %1188 = vmatpush1.msra.mxu0 0.0
        %1189 = vmatprep.subr.mxu0 0.0
        %1190 = vmatpush1.msra.mxu0 0.0
        %1191 = vmatprep.subr.mxu0 0.0
        %1192 = vmatpush1.msra.mxu0 0.0
        %1193 = vmatprep.subr.mxu0 0.0
        %1194 = vmatpush1.msra.mxu0 0.0
        %1195 = vmatprep.subr.mxu0 0.0
        %1196 = vmatpush1.msra.mxu0 0.0
        %1197 = vmatprep.subr.mxu0 0.0
        %1198 = vmatpush1.msra.mxu0 0.0
        %1199 = vmatprep.subr.mxu0 0.0
        %1200 = vmatpush1.msra.mxu0 0.0
        %1201 = vmatprep.subr.mxu0 0.0
        %1202 = vmatpush1.msra.mxu0 0.0
        %1203 = vmatprep.subr.mxu0 0.0
        %1204 = vmatpush1.msra.mxu0 0.0
        %1205 = vmatprep.subr.mxu0 0.0
        %1206 = vmatpush1.msra.mxu0 0.0
        %1207 = vmatprep.subr.mxu0 0.0
        %1208 = vmatpush1.msra.mxu0 0.0
        %1209 = vmatprep.subr.mxu0 0.0
        %1210 = vmatpush1.msra.mxu0 0.0
        %1211 = vmatprep.subr.mxu0 0.0
        %1212 = vmatpush1.msra.mxu0 0.0
        %1213 = vmatprep.subr.mxu0 0.0
        %1214 = vmatpush1.msra.mxu0 0.0
        %1215 = vmatprep.subr.mxu0 0.0
        %1216 = vmatpush1.msra.mxu0 0.0
        %1217 = vmatprep.subr.mxu0 0.0
        %1218 = vmatpush1.msra.mxu0 0.0
        %1219 = vmatprep.subr.mxu0 0.0
        %1220 = vmatpush1.msra.mxu0 0.0
        %1221 = vmatprep.mubr.f32.mxu0 0.0
        %v1222 = vand.u32 %v728, 4294901760
        %1223 = vmatmul.mubr.f32.gmra.mrb[0].mxu0 %v1222
        %v1224 = vpop.f32.mrb[0].mxu0
        %v1225 = vadd.f32 %v1146, %v1224
        %v1226 = vpop.f32.mrb[0].mxu0
        %1227 = vmatprep.mubr.f32.mxu0 0.0
        %v1228 = vand.u32 %v730, 4294901760
        %1229 = vmatmul.mubr.f32.gmra.mrb[0].mxu0 %v1228
        %v1230 = vpop.f32.mrb[0].mxu0
        %v1231 = vadd.f32 %v1152, %v1230
        %v1232 = vpop.f32.mrb[0].mxu0
        %1233 = vdwg.mxu0
        %s1234 = scalar_lea.vmem %s190, 32 [#allocation6]
        %1235 = vst.msk [vmem:[%s1234] sm:$0xff] %vm706, %v1225
        %1236 = vst.msk [vmem:[%s1234 + $0x8] sm:$0xff] %vm706, %v1231
        %1239 = vrot.lane.b32.xlu0 %v1225, 120
        %v1240 = vpop.permute.xlu0 %1239
        %1241 = vrot.lane.b32.xlu0 %v1231, 120
        %v1242 = vpop.permute.xlu0 %1241
        %s1245 = scalar_lea.vmem %s190, 48 [#allocation6]
        %1246 = vst.msk [vmem:[%s1245] sm:$0xff] %vm706, %v1240
        %1247 = vst.msk [vmem:[%s1245 + $0x8] sm:$0xff] %vm706, %v1242
        %s1248 = sand.u32 %s88, 1
        %s1249 = sand.u32 %s88, 1
        %s1250 = smul.addr %s1249, 64
        %s1251 = scalar_lea.vmem [#allocation6], %s1250
        // Predicated region
        $region37: #{tpu_custom_call.1} parent=27 // pred_check
          %p1252 = pneg %p98
        $region38: #{tpu_custom_call.1} parent=27 // pred_check_branch
          %1254 = sbr.rel (%p1252) target = $region40
        $region39: #{tpu_custom_call.1} parent=27 // pred_region
          %s1255 = smul.u32 2, %s22
          %s1256 = smul.addr %s21, 16
          %s1257 = sadd.s32 %s1255, %s1256
          %s1258 = smul.addr %s1257, 8
          %s1259 = scalar_lea.vmem %s2, %s1258
          // Predicated region
          $region41: #{tpu_custom_call.1} parent=39 // pred_check
            _
          $region42: #{tpu_custom_call.1} parent=39 // pred_check_branch
            %1261 = sbr.rel (0) target = $region44
          $region43: #{tpu_custom_call.1} parent=39 // pred_region
            // Predicated region
            $region45: #{tpu_custom_call.1} parent=43 // pred_check
              _
            $region46: #{tpu_custom_call.1} parent=43 // pred_check_branch
              %1263 = sbr.rel (0) target = $region48
            $region47: #{tpu_custom_call.1} parent=43 // pred_region
              // Predicated region
              $region60: #{tpu_custom_call.1} parent=47 // pred_check
                _
              $region61: #{tpu_custom_call.1} parent=47 // pred_check_branch
                %1292 = sbr.rel (0) target = $region63
              $region62: #{tpu_custom_call.1} parent=47 // pred_region
                loop: start=0, step=1, limit=1
                $region64: #{tpu_custom_call.1} parent=62 // loop_pre_header
                  _
                $region65: #{tpu_custom_call.1} parent=62 // loop_header
                  %s1294 = sphi 0, %s1298
                  %p1295 = scmp.ge.s32.totalorder %s1294, 1
                  %s1299 = sphi %s1251, %s1251
                  %s1300 = sphi %s1259, %s1259
                $region66: #{tpu_custom_call.1} parent=62 // loop_header_branch
                  %1297 = sbr.rel (%p1295) target = $region70
                $region67: #{tpu_custom_call.1} parent=62 // loop_body
                  %v1301 = vld [vmem:[%s1299] sm:$0xff]
                  %1302 = vst [vmem:[%s1300] sm:$0xff] %v1301
                  %v1303 = vld [vmem:[%s1299 + $0x8] sm:$0xff]
                  %1304 = vst [vmem:[%s1300 + $0x8] sm:$0xff] %v1303
                  %v1305 = vld [vmem:[%s1299 + $0x10] sm:$0xff]
                  %1306 = vst [vmem:[%s1300 + $0x20] sm:$0xff] %v1305
                  %v1307 = vld [vmem:[%s1299 + $0x18] sm:$0xff]
                  %1308 = vst [vmem:[%s1300 + $0x28] sm:$0xff] %v1307
                  %v1309 = vld [vmem:[%s1299 + $0x20] sm:$0xff]
                  %1310 = vst [vmem:[%s1300 + $0x40] sm:$0xff] %v1309
                  %v1311 = vld [vmem:[%s1299 + $0x28] sm:$0xff]
                  %1312 = vst [vmem:[%s1300 + $0x48] sm:$0xff] %v1311
                  %v1313 = vld [vmem:[%s1299 + $0x30] sm:$0xff]
                  %1314 = vst [vmem:[%s1300 + $0x60] sm:$0xff] %v1313
                  %v1315 = vld [vmem:[%s1299 + $0x38] sm:$0xff]
                  %1316 = vst [vmem:[%s1300 + $0x68] sm:$0xff] %v1315
                $region68: #{tpu_custom_call.1} parent=62 // loop_footer
                  %s1298 = sadd.s32 1, %s1294
                $region69: #{tpu_custom_call.1} parent=62 // loop_footer_branch
                  %1293 = sbr.rel target = $region65
                $region70: #{tpu_custom_call.1} parent=62 // loop_exit
                  _
              $region63: #{tpu_custom_call.1} parent=47 // pred_fallthru
                _
              // Predicated region
              $region71: #{tpu_custom_call.1} parent=47 // pred_check
                _
              $region72: #{tpu_custom_call.1} parent=47 // pred_check_branch
                %1318 = sbr.rel target = $region74
              $region73: #{tpu_custom_call.1} parent=47 // pred_region
                _
              $region74: #{tpu_custom_call.1} parent=47 // pred_fallthru
                _
            $region48: #{tpu_custom_call.1} parent=43 // pred_fallthru
              _
            // Predicated region
            $region49: #{tpu_custom_call.1} parent=43 // pred_check
              _
            $region50: #{tpu_custom_call.1} parent=43 // pred_check_branch
              %1265 = sbr.rel target = $region52
            $region51: #{tpu_custom_call.1} parent=43 // pred_region
              loop: start=0, step=1, limit=1
              $region53: #{tpu_custom_call.1} parent=51 // loop_pre_header
                _
              $region54: #{tpu_custom_call.1} parent=51 // loop_header
                %s1268 = sphi 0, %s1272
                %p1269 = scmp.ge.s32.totalorder %s1268, 1
                %s1273 = sphi %s1251, %s1251
                %s1274 = sphi %s1259, %s1259
              $region55: #{tpu_custom_call.1} parent=51 // loop_header_branch
                %1271 = sbr.rel (%p1269) target = $region59
              $region56: #{tpu_custom_call.1} parent=51 // loop_body
                %v1275 = vld [vmem:[%s1273] sm:$0xff]
                %1276 = vst [vmem:[%s1274] sm:$0xff] %v1275
                %v1277 = vld [vmem:[%s1273 + $0x8] sm:$0xff]
                %1278 = vst [vmem:[%s1274 + $0x8] sm:$0xff] %v1277
                %v1279 = vld [vmem:[%s1273 + $0x10] sm:$0xff]
                %1280 = vst [vmem:[%s1274 + $0x20] sm:$0xff] %v1279
                %v1281 = vld [vmem:[%s1273 + $0x18] sm:$0xff]
                %1282 = vst [vmem:[%s1274 + $0x28] sm:$0xff] %v1281
                %v1283 = vld [vmem:[%s1273 + $0x20] sm:$0xff]
                %1284 = vst [vmem:[%s1274 + $0x40] sm:$0xff] %v1283
                %v1285 = vld [vmem:[%s1273 + $0x28] sm:$0xff]
                %1286 = vst [vmem:[%s1274 + $0x48] sm:$0xff] %v1285
                %v1287 = vld [vmem:[%s1273 + $0x30] sm:$0xff]
                %1288 = vst [vmem:[%s1274 + $0x60] sm:$0xff] %v1287
                %v1289 = vld [vmem:[%s1273 + $0x38] sm:$0xff]
                %1290 = vst [vmem:[%s1274 + $0x68] sm:$0xff] %v1289
              $region57: #{tpu_custom_call.1} parent=51 // loop_footer
                %s1272 = sadd.s32 1, %s1268
              $region58: #{tpu_custom_call.1} parent=51 // loop_footer_branch
                %1267 = sbr.rel target = $region54
              $region59: #{tpu_custom_call.1} parent=51 // loop_exit
                _
            $region52: #{tpu_custom_call.1} parent=43 // pred_fallthru
              _
          $region44: #{tpu_custom_call.1} parent=39 // pred_fallthru
            _
          %1319 = vnop
        $region40: #{tpu_custom_call.1} parent=27 // pred_fallthru
          _
      $region28: #{tpu_custom_call.1} parent=5 // pred_fallthru
        _
      %p1320 = scmp.le.s32.totalorder 2, %s12
      // Predicated region
      $region75: #{tpu_custom_call.1} parent=5 // pred_check
        %p1321 = pneg %p1320
      $region76: #{tpu_custom_call.1} parent=5 // pred_check_branch
        %1323 = sbr.rel (%p1321) target = $region78
      $region77: #{tpu_custom_call.1} parent=5 // pred_region
        %s1324 = ssub.s32 %s12, 2
        // Predicated region
        $region79: #{tpu_custom_call.1} parent=77 // pred_check
          %p1325 = pneg %p104
        $region80: #{tpu_custom_call.1} parent=77 // pred_check_branch
          %1327 = sbr.rel (%p1325) target = $region82
        $region81: #{tpu_custom_call.1} parent=77 // pred_region
          %s1328 = sand.u32 %s89, 1
          %s1329 = sand.u32 %s89, 1
          %s1330 = smul.addr %s1329, 64
          %s1331 = scalar_lea.vmem [#allocation6], %s1330
        $region82: #{tpu_custom_call.1} parent=77 // pred_fallthru
          _
      $region78: #{tpu_custom_call.1} parent=5 // pred_fallthru
        _
    $region6: #{tpu_custom_call.1} parent=1 // loop_footer
      %s16 = sadd.s32 1, %s12
    $region7: #{tpu_custom_call.1} parent=1 // loop_footer_branch
      %11 = sbr.rel target = $region3
    $region8: #{tpu_custom_call.1} parent=1 // loop_exit
      _
    %1332 = vsyncpa [#allocation3], 1
    %s1333 = scalar_lea.sflag [#allocation3], 1
    %1334 = vsyncpa %s1333, 1
    %1335 = vsyncpa [#allocation5], 1

</llo_original>
